<compile_context>
chip_gen: v7x
topology: tpu7x:2x2x1
jax: 0.10.0
libtpu: 0.0.40
codegen_flags: <defaults>
</compile_context>

<pallas_src>
import jax
import jax.numpy as jnp
from jax.experimental import pallas as pl
from jax.experimental.pallas import tpu as pltpu


# ------------------------------ Pallas kernel ------------------------------ #

def _make_kernel(tb):
    def kernel(x_ref, a1w_ref, b1_ref, a2w_ref, b2_ref,
               w1k_ref, bf1_ref, wf2_ref, bf2_ref, o_ref):
        f32 = jnp.float32
        wdt = a1w_ref.dtype            # matmul operand dtype (f32 or bf16)

        # ---- conv1: ONE fused banded matmul, K = 5*28 = 140, N = 256 ----
        xv = x_ref[...]                                        # (28, tb, 28) = (h, b, w)
        lhs = jnp.concatenate([xv[dh:dh + 24] for dh in range(5)], axis=-1)
        lhs = lhs.reshape(24 * tb, 140)                        # rows (i, b), lanes (dh, w)
        h1 = jnp.dot(lhs, a1w_ref[...], preferred_element_type=f32) + b1_ref[...]
        # lanes of h1: parity*128 + jh*10 + c  with conv col j = 2*jh + parity

        # ---- maxpool 2x2 + relu (H-pool = row-pair max, W-pool = vreg-half max) ----
        z = h1.reshape(12, 2, tb, 256)
        zh = jnp.maximum(z[:, 0], z[:, 1])                     # (12, tb, 256)
        a1 = jnp.maximum(jnp.maximum(zh[:, :, :128], zh[:, :, 128:]), 0.0)  # (12, tb, 128)

        # ---- conv2: 5 banded matmuls, K = 128 (dense), N = 256 ----
        # TODO(synk): Dropout2d is identity in eval mode (no stochastic mask here).
        h2 = None
        for dh in range(5):
            l2 = a1[dh:dh + 8].reshape(8 * tb, 128).astype(wdt)
            t = jnp.dot(l2, a2w_ref[dh], preferred_element_type=f32)
            h2 = t if h2 is None else h2 + t
        h2 = h2 + b2_ref[...]                                  # (8*tb, 256)

        # ---- maxpool 2x2 + relu ----
        z2 = h2.reshape(4, 2, tb, 256)
        zh2 = jnp.maximum(z2[:, 0], z2[:, 1])                  # (4, tb, 256)
        a2 = jnp.maximum(jnp.maximum(zh2[:, :, :128], zh2[:, :, 128:]), 0.0)  # (4, tb, 128)

        # ---- fc1 (+relu): flatten folded into prepacked weights, 4 matmuls ----
        # TODO(synk): F.dropout is identity in eval mode (no stochastic mask here).
        hf = None
        for ip in range(4):
            t = jnp.dot(a2[ip].astype(wdt), w1k_ref[ip], preferred_element_type=f32)
            hf = t if hf is None else hf + t
        hf = jnp.maximum(hf + bf1_ref[...], 0.0)               # (tb, 50)

        # ---- fc2 + log_softmax over 128 padded lanes (pad bias = -1e30) ----
        logits = jnp.dot(hf.astype(wdt), wf2_ref[...],
                         preferred_element_type=f32) + bf2_ref[...]     # (tb, 128)
        m = jnp.max(logits, axis=-1, keepdims=True)
        lse = m + jnp.log(jnp.sum(jnp.exp(logits - m), axis=-1, keepdims=True))
        o_ref[...] = (logits - lse).astype(o_ref.dtype)

    return kernel


# ------------------------- weight pre-packing (JAX) ------------------------ #

def prepare_kernel_params(params):
    """Repack PyTorch-convention weights into the banded, lane-dense matrices the
    fused kernel consumes.  Pure (tiny) JAX; runs once per forward under jit.

    Lane layouts (vreg-aligned pooling):
      conv1 out lanes: parity*128 + jh*10 + c        (j = 2*jh + parity, jh<12, c<10)
      conv2 out lanes: parity*128 + j2h*20 + c2      (j2 = 2*j2h + parity, j2h<4, c2<20)
    Pad lanes get zero weight columns; the next layer's zero weight rows ignore them.
    """
    f32 = jnp.float32

    # --- conv1 -> A1f[28*dh + w, p*128 + jh*10 + c] = W1[c,0,dh, w - (2*jh+p)] ---
    w1 = params["conv1_w"][:, 0].astype(f32)                  # (10, 5, 5) = (c, dh, dw)
    w_idx = jnp.arange(28)
    j = 2 * jnp.arange(12)[None, :] + jnp.arange(2)[:, None]  # (2, 12): j[p, jh]
    d = w_idx[:, None, None] - j[None, :, :]                  # (28, 2, 12)  w - j
    band1 = w1[:, :, jnp.clip(d, 0, 4)]                       # (10, 5, 28, 2, 12)
    band1 = jnp.where(((d >= 0) & (d < 5))[None, None], band1, 0.0)
    A1 = jnp.transpose(band1, (1, 2, 3, 4, 0)).reshape(5, 28, 2, 120)
    A1 = jnp.pad(A1, ((0, 0), (0, 0), (0, 0), (0, 8)))        # pad channel block to 128
    A1f = A1.reshape(140, 256)
    b1 = jnp.pad(jnp.tile(params["conv1_b"].astype(f32), 12), (0, 8))
    b1map = jnp.concatenate([b1, b1]).reshape(1, 256)

    # --- conv2 -> A2[dh, j1*10+ci, p2*128 + j2h*20 + c2] = W2[c2,ci,dh, j1 - (2*j2h+p2)] ---
    w2 = params["conv2_w"].astype(f32)                        # (20, 10, 5, 5)
    j1 = jnp.arange(12)
    j2 = 2 * jnp.arange(4)[None, :] + jnp.arange(2)[:, None]  # (2, 4): j2[p2, j2h]
    dw = j1[:, None, None] - j2[None, :, :]                   # (12, 2, 4)
    valid2 = (dw >= 0) & (dw < 5)
    band2 = w2[:, :, :, jnp.clip(dw, 0, 4)]                   # (20, 10, 5, 12, 2, 4)
    band2 = jnp.where(valid2[None, None, None], band2, 0.0)
    A2 = jnp.transpose(band2, (2, 3, 1, 4, 5, 0)).reshape(5, 120, 2, 80)
    A2 = jnp.pad(A2, ((0, 0), (0, 8), (0, 0), (0, 48)))       # rows->128, cols->128
    A2 = A2.reshape(5, 128, 256)
    b2 = jnp.pad(jnp.tile(params["conv2_b"].astype(f32), 4), (0, 48))
    b2map = jnp.concatenate([b2, b2]).reshape(1, 256)

    # --- fc1 -> W1k[i2, j2h*20 + c2, n] = FC1[n, c2*16 + i2*4 + j2h] ---
    fc1 = params["fc1_w"].astype(f32)                         # (50, 320), PyTorch (out,in)
    i2 = jnp.arange(4)
    j2h = jnp.arange(4)
    c2 = jnp.arange(20)
    feat = (c2[None, None, :] * 16 + i2[:, None, None] * 4
            + j2h[None, :, None])                             # (4, 4, 20)
    Wg = fc1[:, feat]                                         # (50, 4, 4, 20)
    W1k = jnp.transpose(Wg, (1, 2, 3, 0)).reshape(4, 80, 50)
    W1k = jnp.pad(W1k, ((0, 0), (0, 48), (0, 0)))             # (4, 128, 50)
    bf1 = params["fc1_b"].astype(f32).reshape(1, 50)

    # --- fc2: lane-dense 128-wide output; pad bias = -1e30 so log_softmax ignores it ---
    wf2 = jnp.pad(params["fc2_w"].astype(f32).T, ((0, 0), (0, 118)))   # (50, 128)
    bf2 = jnp.full((128,), -1e30, f32).at[:10].set(params["fc2_b"].astype(f32))
    bf2 = bf2.reshape(1, 128)

    return A1f, b1map, A2, b2map, W1k, bf1, wf2, bf2


# ------------------------------ forward wrapper ---------------------------- #

def _round_up(x, m):
    return (x + m - 1) // m * m


def single_network_forward(x_nchw, params, use_bf16=False):
    """x_nchw: (B, 1, 28, 28) float32 -> (B, 10) log-probabilities (eval mode)."""
    B = x_nchw.shape[0]
    kp = prepare_kernel_params(params)
    if use_bf16:
        # Recommended for v5e's bf16-native MXU (also helps v6e/v7x); f32 accumulation
        # is preserved via preferred_element_type inside the kernel.
        A1f, b1m, A2, b2m, W1k, bf1, wf2, bf2 = kp
        bf16 = jnp.bfloat16
        kp = (A1f.astype(bf16), b1m, A2.astype(bf16), b2m,
              W1k.astype(bf16), bf1, wf2.astype(bf16), bf2)

    # Batch tiling: tiles up to 256 rows (review opt #2), bp a multiple of tb.
    # For bp >= 256 keep >= 2 grid steps so v7x's two TensorCores both get work.
    bp8 = _round_up(B, 8)
    num_tiles = max(1, (bp8 + 255) // 256)
    if bp8 >= 256:
        num_tiles = max(num_tiles, 2)
    tb = _round_up((bp8 + num_tiles - 1) // num_tiles, 8)
    bp = tb * num_tiles
    grid = (bp // tb,)

    in_dtype = jnp.bfloat16 if use_bf16 else jnp.float32
    x = x_nchw[:, 0, :, :].astype(in_dtype)                   # (B, 28, 28)
    if bp != B:
        x = jnp.pad(x, ((0, bp - B), (0, 0), (0, 0)))
    x_hbw = jnp.transpose(x, (1, 0, 2))                       # (28, bp, 28) = (h, b, w)

    weight_spec3 = lambda shape: pl.BlockSpec(shape, lambda i: (0, 0, 0))  # noqa: E731
    weight_spec2 = lambda shape: pl.BlockSpec(shape, lambda i: (0, 0))     # noqa: E731

    flops = 2 * bp * (24 * 140 * 256 + 5 * 8 * 128 * 256 + 4 * 128 * 50 + 50 * 128)
    weight_bytes = 4 * (140 * 256 + 256 + 5 * 128 * 256 + 256
                        + 4 * 128 * 50 + 50 + 50 * 128 + 128)
    bytes_accessed = 4 * bp * (28 * 28 + 128) + weight_bytes

    out = pl.pallas_call(
        _make_kernel(tb),
        out_shape=jax.ShapeDtypeStruct((bp, 128), jnp.float32),
        grid=grid,
        in_specs=[
            pl.BlockSpec((28, tb, 28), lambda i: (0, i, 0)),  # input batch tile
            weight_spec2((140, 256)),                         # conv1 fused band weights
            weight_spec2((1, 256)),                           # conv1 bias map
            weight_spec3((5, 128, 256)),                      # conv2 band weights
            weight_spec2((1, 256)),                           # conv2 bias map
            weight_spec3((4, 128, 50)),                       # fc1 packed weights
            weight_spec2((1, 50)),                            # fc1 bias
            weight_spec2((50, 128)),                          # fc2 weight (in, out-pad)
            weight_spec2((1, 128)),                           # fc2 bias (pad = -1e30)
        ],
        out_specs=pl.BlockSpec((tb, 128), lambda i: (i, 0)),  # lane-dense output
        compiler_params=pltpu.CompilerParams(
            dimension_semantics=("parallel",),
            vmem_limit_bytes=32 * 1024 * 1024,
        ),
        cost_estimate=pl.CostEstimate(
            flops=flops, transcendentals=129 * bp, bytes_accessed=bytes_accessed),
    )(x_hbw, *kp)

    return out[:B, :10]


# --------------------------- pure-JAX reference ----------------------------- #

def reference_forward(x_nchw, params):
    dn = ("NCHW", "OIHW", "NCHW")
    y = jax.lax.conv_general_dilated(x_nchw, params["conv1_w"], (1, 1), "VALID",
                                     dimension_numbers=dn)
    y = y + params["conv1_b"][None, :, None, None]
    y = jax.lax.reduce_window(y, -jnp.inf, jax.lax.max, (1, 1, 2, 2), (1, 1, 2, 2), "VALID")
    y = jnp.maximum(y, 0.0)
    y = jax.lax.conv_general_dilated(y, params["conv2_w"], (1, 1), "VALID",
                                     dimension_numbers=dn)
    y = y + params["conv2_b"][None, :, None, None]
    y = jax.lax.reduce_window(y, -jnp.inf, jax.lax.max, (1, 1, 2, 2), (1, 1, 2, 2), "VALID")
    y = jnp.maximum(y, 0.0)
    y = y.reshape(y.shape[0], -1)                               # PyTorch NCHW flatten
    y = jnp.maximum(y @ params["fc1_w"].T + params["fc1_b"], 0.0)
    y = y @ params["fc2_w"].T + params["fc2_b"]
    return jax.nn.log_softmax(y, axis=-1)


# ---------------------------------- params ---------------------------------- #

def init_params(key):
    ks = jax.random.split(key, 8)
    s = 0.1
    return {
        "conv1_w": s * jax.random.normal(ks[0], (10, 1, 5, 5), jnp.float32),
        "conv1_b": s * jax.random.normal(ks[1], (10,), jnp.float32),
        "conv2_w": s * jax.random.normal(ks[2], (20, 10, 5, 5), jnp.float32),
        "conv2_b": s * jax.random.normal(ks[3], (20,), jnp.float32),
        "fc1_w": s * jax.random.normal(ks[4], (50, 320), jnp.float32),
        "fc1_b": s * jax.random.normal(ks[5], (50,), jnp.float32),
        "fc2_w": s * jax.random.normal(ks[6], (10, 50), jnp.float32),
        "fc2_b": s * jax.random.normal(ks[7], (10,), jnp.float32),
    }


if __name__ == "__main__":
    key = jax.random.PRNGKey(0)
    pkey, xkey = jax.random.split(key)
    params = init_params(pkey)

    # Spatial size 28x28 is dictated by the architecture (fc1 expects 320 = 20*4*4).
    x = jax.random.normal(xkey, (2, 1, 28, 28), jnp.float32)

    out = jax.jit(single_network_forward)(x, params)
    out = jax.block_until_ready(out)

    assert out.shape == (2, 10)
    # log-softmax rows should sum (in prob space) to ~1
    assert jnp.allclose(jnp.sum(jnp.exp(out), axis=-1), 1.0, atol=1e-4)
    # match the pure-JAX/XLA reference of the PyTorch module (eval mode)
    ref = reference_forward(x, params)
    assert jnp.allclose(out, ref, atol=1e-3, rtol=1e-3)
    print("KERNEL_OK")
</pallas_src>

<mosaic_0001>
module attributes {stable_mosaic.version = 11 : i64} {
  func.func @kernel(%arg0: i32, %arg1: memref<28x8x28xf32, #tpu.memory_space<vmem>>, %arg2: memref<140x256xf32, #tpu.memory_space<vmem>>, %arg3: memref<1x256xf32, #tpu.memory_space<vmem>>, %arg4: memref<5x128x256xf32, #tpu.memory_space<vmem>>, %arg5: memref<1x256xf32, #tpu.memory_space<vmem>>, %arg6: memref<4x128x50xf32, #tpu.memory_space<vmem>>, %arg7: memref<1x50xf32, #tpu.memory_space<vmem>>, %arg8: memref<50x128xf32, #tpu.memory_space<vmem>>, %arg9: memref<1x128xf32, #tpu.memory_space<vmem>>, %arg10: memref<8x128xf32, #tpu.memory_space<vmem>>) attributes {dimension_semantics = [#tpu.dimension_semantics<parallel>], iteration_bounds = array<i64: 1>, scalar_prefetch = 0 : i64, scratch_operands = 0 : i64, tpu.core_type = #tpu.core_type<tc>, window_params = [{transform_indices = @transform_0, window_bounds = array<i64: 28, 8, 28>}, {pipeline_mode = #tpu.pipeline_mode<synchronous>, transform_indices = @transform_1, window_bounds = array<i64: 140, 256>}, {pipeline_mode = #tpu.pipeline_mode<synchronous>, transform_indices = @transform_2, window_bounds = array<i64: 1, 256>}, {pipeline_mode = #tpu.pipeline_mode<synchronous>, transform_indices = @transform_3, window_bounds = array<i64: 5, 128, 256>}, {pipeline_mode = #tpu.pipeline_mode<synchronous>, transform_indices = @transform_4, window_bounds = array<i64: 1, 256>}, {pipeline_mode = #tpu.pipeline_mode<synchronous>, transform_indices = @transform_5, window_bounds = array<i64: 4, 128, 50>}, {pipeline_mode = #tpu.pipeline_mode<synchronous>, transform_indices = @transform_6, window_bounds = array<i64: 1, 50>}, {pipeline_mode = #tpu.pipeline_mode<synchronous>, transform_indices = @transform_7, window_bounds = array<i64: 50, 128>}, {pipeline_mode = #tpu.pipeline_mode<synchronous>, transform_indices = @transform_8, window_bounds = array<i64: 1, 128>}, {transform_indices = @transform_9, window_bounds = array<i64: 8, 128>}]} {
    %c0 = arith.constant 0 : index
    %c0_0 = arith.constant 0 : index
    %c0_1 = arith.constant 0 : index
    %0 = vector.load %arg1[%c0, %c0_0, %c0_1] : memref<28x8x28xf32, #tpu.memory_space<vmem>>, vector<28x8x28xf32>
    %1 = vector.extract_strided_slice %0 {offsets = [0, 0, 0], sizes = [24, 8, 28], strides = [1, 1, 1]} : vector<28x8x28xf32> to vector<24x8x28xf32>
    %2 = vector.extract_strided_slice %0 {offsets = [1, 0, 0], sizes = [24, 8, 28], strides = [1, 1, 1]} : vector<28x8x28xf32> to vector<24x8x28xf32>
    %3 = vector.extract_strided_slice %0 {offsets = [2, 0, 0], sizes = [24, 8, 28], strides = [1, 1, 1]} : vector<28x8x28xf32> to vector<24x8x28xf32>
    %4 = vector.extract_strided_slice %0 {offsets = [3, 0, 0], sizes = [24, 8, 28], strides = [1, 1, 1]} : vector<28x8x28xf32> to vector<24x8x28xf32>
    %5 = vector.extract_strided_slice %0 {offsets = [4, 0, 0], sizes = [24, 8, 28], strides = [1, 1, 1]} : vector<28x8x28xf32> to vector<24x8x28xf32>
    %6 = tpu.concatenate %1, %2, %3, %4, %5 in 2 : vector<24x8x28xf32>, vector<24x8x28xf32>, vector<24x8x28xf32>, vector<24x8x28xf32>, vector<24x8x28xf32> -> vector<24x8x140xf32>
    %7 = vector.shape_cast %6 : vector<24x8x140xf32> to vector<192x140xf32>
    %c0_2 = arith.constant 0 : index
    %c0_3 = arith.constant 0 : index
    %8 = vector.load %arg2[%c0_2, %c0_3] : memref<140x256xf32, #tpu.memory_space<vmem>>, vector<140x256xf32>
    %cst = arith.constant dense<0.000000e+00> : vector<192x256xf32>
    %9 = tpu.matmul %7, %8, %cst {dimension_numbers = #tpu.dot_dimension_numbers<[1], [0], [0], [1], [0, 0, 1, 1], [], []>} : vector<192x140xf32>, vector<140x256xf32>, vector<192x256xf32> -> vector<192x256xf32>
    %c0_4 = arith.constant 0 : index
    %c0_5 = arith.constant 0 : index
    %10 = vector.load %arg3[%c0_4, %c0_5] : memref<1x256xf32, #tpu.memory_space<vmem>>, vector<1x256xf32>
    %11 = vector.broadcast %10 : vector<1x256xf32> to vector<192x256xf32>
    %12 = arith.addf %9, %11 : vector<192x256xf32>
    %13 = vector.shape_cast %12 : vector<192x256xf32> to vector<12x2x8x256xf32>
    %14 = vector.extract_strided_slice %13 {offsets = [0, 0, 0, 0], sizes = [12, 1, 8, 256], strides = [1, 1, 1, 1]} : vector<12x2x8x256xf32> to vector<12x1x8x256xf32>
    %15 = vector.shape_cast %14 : vector<12x1x8x256xf32> to vector<12x8x256xf32>
    %16 = vector.extract_strided_slice %13 {offsets = [0, 1, 0, 0], sizes = [12, 1, 8, 256], strides = [1, 1, 1, 1]} : vector<12x2x8x256xf32> to vector<12x1x8x256xf32>
    %17 = vector.shape_cast %16 : vector<12x1x8x256xf32> to vector<12x8x256xf32>
    %18 = arith.maximumf %15, %17 : vector<12x8x256xf32>
    %19 = vector.extract_strided_slice %18 {offsets = [0, 0, 0], sizes = [12, 8, 128], strides = [1, 1, 1]} : vector<12x8x256xf32> to vector<12x8x128xf32>
    %20 = vector.extract_strided_slice %18 {offsets = [0, 0, 128], sizes = [12, 8, 128], strides = [1, 1, 1]} : vector<12x8x256xf32> to vector<12x8x128xf32>
    %21 = arith.maximumf %19, %20 : vector<12x8x128xf32>
    %cst_6 = arith.constant 0.000000e+00 : f32
    %22 = vector.broadcast %cst_6 : f32 to vector<12x8x128xf32>
    %23 = arith.maximumf %21, %22 : vector<12x8x128xf32>
    %24 = vector.extract_strided_slice %23 {offsets = [0, 0, 0], sizes = [8, 8, 128], strides = [1, 1, 1]} : vector<12x8x128xf32> to vector<8x8x128xf32>
    %25 = vector.shape_cast %24 : vector<8x8x128xf32> to vector<64x128xf32>
    %c0_7 = arith.constant 0 : index
    %c0_8 = arith.constant 0 : index
    %c0_9 = arith.constant 0 : index
    %26 = vector.load %arg4[%c0_7, %c0_8, %c0_9] : memref<5x128x256xf32, #tpu.memory_space<vmem>>, vector<1x128x256xf32>
    %27 = vector.shape_cast %26 : vector<1x128x256xf32> to vector<128x256xf32>
    %cst_10 = arith.constant dense<0.000000e+00> : vector<64x256xf32>
    %28 = tpu.matmul %25, %27, %cst_10 {dimension_numbers = #tpu.dot_dimension_numbers<[1], [0], [0], [1], [0, 0, 1, 1], [], []>} : vector<64x128xf32>, vector<128x256xf32>, vector<64x256xf32> -> vector<64x256xf32>
    %29 = vector.extract_strided_slice %23 {offsets = [1, 0, 0], sizes = [8, 8, 128], strides = [1, 1, 1]} : vector<12x8x128xf32> to vector<8x8x128xf32>
    %30 = vector.shape_cast %29 : vector<8x8x128xf32> to vector<64x128xf32>
    %c1 = arith.constant 1 : index
    %c0_11 = arith.constant 0 : index
    %c0_12 = arith.constant 0 : index
    %31 = vector.load %arg4[%c1, %c0_11, %c0_12] : memref<5x128x256xf32, #tpu.memory_space<vmem>>, vector<1x128x256xf32>
    %32 = vector.shape_cast %31 : vector<1x128x256xf32> to vector<128x256xf32>
    %cst_13 = arith.constant dense<0.000000e+00> : vector<64x256xf32>
    %33 = tpu.matmul %30, %32, %cst_13 {dimension_numbers = #tpu.dot_dimension_numbers<[1], [0], [0], [1], [0, 0, 1, 1], [], []>} : vector<64x128xf32>, vector<128x256xf32>, vector<64x256xf32> -> vector<64x256xf32>
    %34 = arith.addf %28, %33 : vector<64x256xf32>
    %35 = vector.extract_strided_slice %23 {offsets = [2, 0, 0], sizes = [8, 8, 128], strides = [1, 1, 1]} : vector<12x8x128xf32> to vector<8x8x128xf32>
    %36 = vector.shape_cast %35 : vector<8x8x128xf32> to vector<64x128xf32>
    %c2 = arith.constant 2 : index
    %c0_14 = arith.constant 0 : index
    %c0_15 = arith.constant 0 : index
    %37 = vector.load %arg4[%c2, %c0_14, %c0_15] : memref<5x128x256xf32, #tpu.memory_space<vmem>>, vector<1x128x256xf32>
    %38 = vector.shape_cast %37 : vector<1x128x256xf32> to vector<128x256xf32>
    %cst_16 = arith.constant dense<0.000000e+00> : vector<64x256xf32>
    %39 = tpu.matmul %36, %38, %cst_16 {dimension_numbers = #tpu.dot_dimension_numbers<[1], [0], [0], [1], [0, 0, 1, 1], [], []>} : vector<64x128xf32>, vector<128x256xf32>, vector<64x256xf32> -> vector<64x256xf32>
    %40 = arith.addf %34, %39 : vector<64x256xf32>
    %41 = vector.extract_strided_slice %23 {offsets = [3, 0, 0], sizes = [8, 8, 128], strides = [1, 1, 1]} : vector<12x8x128xf32> to vector<8x8x128xf32>
    %42 = vector.shape_cast %41 : vector<8x8x128xf32> to vector<64x128xf32>
    %c3 = arith.constant 3 : index
    %c0_17 = arith.constant 0 : index
    %c0_18 = arith.constant 0 : index
    %43 = vector.load %arg4[%c3, %c0_17, %c0_18] : memref<5x128x256xf32, #tpu.memory_space<vmem>>, vector<1x128x256xf32>
    %44 = vector.shape_cast %43 : vector<1x128x256xf32> to vector<128x256xf32>
    %cst_19 = arith.constant dense<0.000000e+00> : vector<64x256xf32>
    %45 = tpu.matmul %42, %44, %cst_19 {dimension_numbers = #tpu.dot_dimension_numbers<[1], [0], [0], [1], [0, 0, 1, 1], [], []>} : vector<64x128xf32>, vector<128x256xf32>, vector<64x256xf32> -> vector<64x256xf32>
    %46 = arith.addf %40, %45 : vector<64x256xf32>
    %47 = vector.extract_strided_slice %23 {offsets = [4, 0, 0], sizes = [8, 8, 128], strides = [1, 1, 1]} : vector<12x8x128xf32> to vector<8x8x128xf32>
    %48 = vector.shape_cast %47 : vector<8x8x128xf32> to vector<64x128xf32>
    %c4 = arith.constant 4 : index
    %c0_20 = arith.constant 0 : index
    %c0_21 = arith.constant 0 : index
    %49 = vector.load %arg4[%c4, %c0_20, %c0_21] : memref<5x128x256xf32, #tpu.memory_space<vmem>>, vector<1x128x256xf32>
    %50 = vector.shape_cast %49 : vector<1x128x256xf32> to vector<128x256xf32>
    %cst_22 = arith.constant dense<0.000000e+00> : vector<64x256xf32>
    %51 = tpu.matmul %48, %50, %cst_22 {dimension_numbers = #tpu.dot_dimension_numbers<[1], [0], [0], [1], [0, 0, 1, 1], [], []>} : vector<64x128xf32>, vector<128x256xf32>, vector<64x256xf32> -> vector<64x256xf32>
    %52 = arith.addf %46, %51 : vector<64x256xf32>
    %c0_23 = arith.constant 0 : index
    %c0_24 = arith.constant 0 : index
    %53 = vector.load %arg5[%c0_23, %c0_24] : memref<1x256xf32, #tpu.memory_space<vmem>>, vector<1x256xf32>
    %54 = vector.broadcast %53 : vector<1x256xf32> to vector<64x256xf32>
    %55 = arith.addf %52, %54 : vector<64x256xf32>
    %56 = vector.shape_cast %55 : vector<64x256xf32> to vector<4x2x8x256xf32>
    %57 = vector.extract_strided_slice %56 {offsets = [0, 0, 0, 0], sizes = [4, 1, 8, 256], strides = [1, 1, 1, 1]} : vector<4x2x8x256xf32> to vector<4x1x8x256xf32>
    %58 = vector.shape_cast %57 : vector<4x1x8x256xf32> to vector<4x8x256xf32>
    %59 = vector.extract_strided_slice %56 {offsets = [0, 1, 0, 0], sizes = [4, 1, 8, 256], strides = [1, 1, 1, 1]} : vector<4x2x8x256xf32> to vector<4x1x8x256xf32>
    %60 = vector.shape_cast %59 : vector<4x1x8x256xf32> to vector<4x8x256xf32>
    %61 = arith.maximumf %58, %60 : vector<4x8x256xf32>
    %62 = vector.extract_strided_slice %61 {offsets = [0, 0, 0], sizes = [4, 8, 128], strides = [1, 1, 1]} : vector<4x8x256xf32> to vector<4x8x128xf32>
    %63 = vector.extract_strided_slice %61 {offsets = [0, 0, 128], sizes = [4, 8, 128], strides = [1, 1, 1]} : vector<4x8x256xf32> to vector<4x8x128xf32>
    %64 = arith.maximumf %62, %63 : vector<4x8x128xf32>
    %cst_25 = arith.constant 0.000000e+00 : f32
    %65 = vector.broadcast %cst_25 : f32 to vector<4x8x128xf32>
    %66 = arith.maximumf %64, %65 : vector<4x8x128xf32>
    %67 = vector.extract_strided_slice %66 {offsets = [0, 0, 0], sizes = [1, 8, 128], strides = [1, 1, 1]} : vector<4x8x128xf32> to vector<1x8x128xf32>
    %68 = vector.shape_cast %67 : vector<1x8x128xf32> to vector<8x128xf32>
    %c0_26 = arith.constant 0 : index
    %c0_27 = arith.constant 0 : index
    %c0_28 = arith.constant 0 : index
    %69 = vector.load %arg6[%c0_26, %c0_27, %c0_28] : memref<4x128x50xf32, #tpu.memory_space<vmem>>, vector<1x128x50xf32>
    %70 = vector.shape_cast %69 : vector<1x128x50xf32> to vector<128x50xf32>
    %cst_29 = arith.constant dense<0.000000e+00> : vector<8x50xf32>
    %71 = tpu.matmul %68, %70, %cst_29 {dimension_numbers = #tpu.dot_dimension_numbers<[1], [0], [0], [1], [0, 0, 1, 1], [], []>} : vector<8x128xf32>, vector<128x50xf32>, vector<8x50xf32> -> vector<8x50xf32>
    %72 = vector.extract_strided_slice %66 {offsets = [1, 0, 0], sizes = [1, 8, 128], strides = [1, 1, 1]} : vector<4x8x128xf32> to vector<1x8x128xf32>
    %73 = vector.shape_cast %72 : vector<1x8x128xf32> to vector<8x128xf32>
    %c1_30 = arith.constant 1 : index
    %c0_31 = arith.constant 0 : index
    %c0_32 = arith.constant 0 : index
    %74 = vector.load %arg6[%c1_30, %c0_31, %c0_32] : memref<4x128x50xf32, #tpu.memory_space<vmem>>, vector<1x128x50xf32>
    %75 = vector.shape_cast %74 : vector<1x128x50xf32> to vector<128x50xf32>
    %cst_33 = arith.constant dense<0.000000e+00> : vector<8x50xf32>
    %76 = tpu.matmul %73, %75, %cst_33 {dimension_numbers = #tpu.dot_dimension_numbers<[1], [0], [0], [1], [0, 0, 1, 1], [], []>} : vector<8x128xf32>, vector<128x50xf32>, vector<8x50xf32> -> vector<8x50xf32>
    %77 = arith.addf %71, %76 : vector<8x50xf32>
    %78 = vector.extract_strided_slice %66 {offsets = [2, 0, 0], sizes = [1, 8, 128], strides = [1, 1, 1]} : vector<4x8x128xf32> to vector<1x8x128xf32>
    %79 = vector.shape_cast %78 : vector<1x8x128xf32> to vector<8x128xf32>
    %c2_34 = arith.constant 2 : index
    %c0_35 = arith.constant 0 : index
    %c0_36 = arith.constant 0 : index
    %80 = vector.load %arg6[%c2_34, %c0_35, %c0_36] : memref<4x128x50xf32, #tpu.memory_space<vmem>>, vector<1x128x50xf32>
    %81 = vector.shape_cast %80 : vector<1x128x50xf32> to vector<128x50xf32>
    %cst_37 = arith.constant dense<0.000000e+00> : vector<8x50xf32>
    %82 = tpu.matmul %79, %81, %cst_37 {dimension_numbers = #tpu.dot_dimension_numbers<[1], [0], [0], [1], [0, 0, 1, 1], [], []>} : vector<8x128xf32>, vector<128x50xf32>, vector<8x50xf32> -> vector<8x50xf32>
    %83 = arith.addf %77, %82 : vector<8x50xf32>
    %84 = vector.extract_strided_slice %66 {offsets = [3, 0, 0], sizes = [1, 8, 128], strides = [1, 1, 1]} : vector<4x8x128xf32> to vector<1x8x128xf32>
    %85 = vector.shape_cast %84 : vector<1x8x128xf32> to vector<8x128xf32>
    %c3_38 = arith.constant 3 : index
    %c0_39 = arith.constant 0 : index
    %c0_40 = arith.constant 0 : index
    %86 = vector.load %arg6[%c3_38, %c0_39, %c0_40] : memref<4x128x50xf32, #tpu.memory_space<vmem>>, vector<1x128x50xf32>
    %87 = vector.shape_cast %86 : vector<1x128x50xf32> to vector<128x50xf32>
    %cst_41 = arith.constant dense<0.000000e+00> : vector<8x50xf32>
    %88 = tpu.matmul %85, %87, %cst_41 {dimension_numbers = #tpu.dot_dimension_numbers<[1], [0], [0], [1], [0, 0, 1, 1], [], []>} : vector<8x128xf32>, vector<128x50xf32>, vector<8x50xf32> -> vector<8x50xf32>
    %89 = arith.addf %83, %88 : vector<8x50xf32>
    %c0_42 = arith.constant 0 : index
    %c0_43 = arith.constant 0 : index
    %90 = vector.load %arg7[%c0_42, %c0_43] : memref<1x50xf32, #tpu.memory_space<vmem>>, vector<1x50xf32>
    %91 = vector.broadcast %90 : vector<1x50xf32> to vector<8x50xf32>
    %92 = arith.addf %89, %91 : vector<8x50xf32>
    %cst_44 = arith.constant 0.000000e+00 : f32
    %93 = vector.broadcast %cst_44 : f32 to vector<8x50xf32>
    %94 = arith.maximumf %92, %93 : vector<8x50xf32>
    %c0_45 = arith.constant 0 : index
    %c0_46 = arith.constant 0 : index
    %95 = vector.load %arg8[%c0_45, %c0_46] : memref<50x128xf32, #tpu.memory_space<vmem>>, vector<50x128xf32>
    %cst_47 = arith.constant dense<0.000000e+00> : vector<8x128xf32>
    %96 = tpu.matmul %94, %95, %cst_47 {dimension_numbers = #tpu.dot_dimension_numbers<[1], [0], [0], [1], [0, 0, 1, 1], [], []>} : vector<8x50xf32>, vector<50x128xf32>, vector<8x128xf32> -> vector<8x128xf32>
    %c0_48 = arith.constant 0 : index
    %c0_49 = arith.constant 0 : index
    %97 = vector.load %arg9[%c0_48, %c0_49] : memref<1x128xf32, #tpu.memory_space<vmem>>, vector<1x128xf32>
    %98 = vector.broadcast %97 : vector<1x128xf32> to vector<8x128xf32>
    %99 = arith.addf %96, %98 : vector<8x128xf32>
    %cst_50 = arith.constant dense<0xFF800000> : vector<8xf32>
    %100 = vector.multi_reduction <maximumf>, %99, %cst_50 [1] : vector<8x128xf32> to vector<8xf32>
    %101 = vector.shape_cast %100 : vector<8xf32> to vector<8x1xf32>
    %102 = vector.broadcast %101 : vector<8x1xf32> to vector<8x128xf32>
    %103 = arith.subf %99, %102 : vector<8x128xf32>
    %104 = math.exp %103 : vector<8x128xf32>
    %cst_51 = arith.constant dense<0.000000e+00> : vector<8xf32>
    %105 = vector.multi_reduction <add>, %104, %cst_51 [1] : vector<8x128xf32> to vector<8xf32>
    %106 = vector.shape_cast %105 : vector<8xf32> to vector<8x1xf32>
    %107 = math.log %106 : vector<8x1xf32>
    %108 = arith.addf %101, %107 : vector<8x1xf32>
    %109 = vector.broadcast %108 : vector<8x1xf32> to vector<8x128xf32>
    %110 = arith.subf %99, %109 : vector<8x128xf32>
    %c0_52 = arith.constant 0 : index
    %c0_53 = arith.constant 0 : index
    %111 = vector.load %arg10[%c0_52, %c0_53] : memref<8x128xf32, #tpu.memory_space<vmem>>, vector<8x128xf32>
    tpu.vector_store %arg10[%c0_52, %c0_53], %110 {strides = array<i32>} : memref<8x128xf32, #tpu.memory_space<vmem>>, vector<8x128xf32>,
    return
  }
  func.func @transform_0(%arg0: i32) -> (i32, i32, i32) {
    %c0_i32 = arith.constant 0 : i32
    %c0_i32_0 = arith.constant 0 : i32
    %c0_i32_1 = arith.constant 0 : i32
    return %c0_i32, %arg0, %c0_i32_0 : i32, i32, i32
  }
  func.func @transform_1(%arg0: i32) -> (i32, i32) {
    %c0_i32 = arith.constant 0 : i32
    %c0_i32_0 = arith.constant 0 : i32
    %c0_i32_1 = arith.constant 0 : i32
    return %c0_i32, %c0_i32_0 : i32, i32
  }
  func.func @transform_2(%arg0: i32) -> (i32, i32) {
    %c0_i32 = arith.constant 0 : i32
    %c0_i32_0 = arith.constant 0 : i32
    %c0_i32_1 = arith.constant 0 : i32
    return %c0_i32, %c0_i32_0 : i32, i32
  }
  func.func @transform_3(%arg0: i32) -> (i32, i32, i32) {
    %c0_i32 = arith.constant 0 : i32
    %c0_i32_0 = arith.constant 0 : i32
    %c0_i32_1 = arith.constant 0 : i32
    %c0_i32_2 = arith.constant 0 : i32
    return %c0_i32, %c0_i32_0, %c0_i32_1 : i32, i32, i32
  }
  func.func @transform_4(%arg0: i32) -> (i32, i32) {
    %c0_i32 = arith.constant 0 : i32
    %c0_i32_0 = arith.constant 0 : i32
    %c0_i32_1 = arith.constant 0 : i32
    return %c0_i32, %c0_i32_0 : i32, i32
  }
  func.func @transform_5(%arg0: i32) -> (i32, i32, i32) {
    %c0_i32 = arith.constant 0 : i32
    %c0_i32_0 = arith.constant 0 : i32
    %c0_i32_1 = arith.constant 0 : i32
    %c0_i32_2 = arith.constant 0 : i32
    return %c0_i32, %c0_i32_0, %c0_i32_1 : i32, i32, i32
  }
  func.func @transform_6(%arg0: i32) -> (i32, i32) {
    %c0_i32 = arith.constant 0 : i32
    %c0_i32_0 = arith.constant 0 : i32
    %c0_i32_1 = arith.constant 0 : i32
    return %c0_i32, %c0_i32_0 : i32, i32
  }
  func.func @transform_7(%arg0: i32) -> (i32, i32) {
    %c0_i32 = arith.constant 0 : i32
    %c0_i32_0 = arith.constant 0 : i32
    %c0_i32_1 = arith.constant 0 : i32
    return %c0_i32, %c0_i32_0 : i32, i32
  }
  func.func @transform_8(%arg0: i32) -> (i32, i32) {
    %c0_i32 = arith.constant 0 : i32
    %c0_i32_0 = arith.constant 0 : i32
    %c0_i32_1 = arith.constant 0 : i32
    return %c0_i32, %c0_i32_0 : i32, i32
  }
  func.func @transform_9(%arg0: i32) -> (i32, i32) {
    %c0_i32 = arith.constant 0 : i32
    %c0_i32_0 = arith.constant 0 : i32
    return %arg0, %c0_i32 : i32, i32
  }
}

</mosaic_0001>

<llo_original>
// kernel: tile.13
$region0: #{tile.13}
  #allocation0 [shape = 's32[1]{0}', space=sflag, size = 0x4, scoped, tag = 'scoped memory for tile.13']
  %s0 = inlined_call_operand.vmem [shape: f32[10], index: 0, kind: input, shape index: {}]
  %s1 = inlined_call_operand.vmem [shape: f32[12,10], index: 1, kind: output, shape index: {}]
  // Predicated region
  $region2: #{tile.13} parent=0 // pred_check
    _
  $region3: #{tile.13} parent=0 // pred_check_branch
    %3 = sbr.rel (0) target = $region5
  $region4: #{tile.13} parent=0 // pred_region
    _
  $region5: #{tile.13} parent=0 // pred_fallthru
    _
  %v4 = vld [vmem:[%s0] ss:$0 sm:$0xff]
  %5 = vst [vmem:[%s1] sm:$0xff] %v4
  %s6 = scalar_lea.vmem %s1, 8
  %7 = vst [vmem:[%s6] sm:$0xff] %v4

// kernel: tile.14
$region0: #{tile.14}
  %s0 = inlined_call_operand.vmem [shape: f32[12,10], index: 0, kind: input, shape index: {}]
  %s1 = inlined_call_operand.vmem [shape: f32[120], index: 1, kind: output, shape index: {}]
  $region1: #{tile.14} parent=0
    #allocation0 [shape = 'u8[4096]{0}', space=vmem, size = 0x1000, scoped, tag = 'scoped mem for output reshape']
    %v2 = vld [vmem:[%s0] sm:$0x1]
    %vm3 = vcmask 80896
    %4 = vst.msk [vmem:[#allocation0] sm:$0x1] %vm3, %v2
    %s5 = scalar_lea.vmem %s0, 11
    %v6 = vld [vmem:[%s5] sm:$0x1]
    %7 = vrot.lane.b32.xlu0 %v6, 110
    %v8 = vpop.permute.xlu0 %7
    %vm9 = vcmask 982896
    %10 = vst.msk [vmem:[#allocation0] sm:$0x1] %vm9, %v8
    %s11 = scalar_lea.vmem %s0, 10
    %v12 = vld [vmem:[%s11] sm:$0x1]
    %13 = vrot.lane.b32.xlu0 %v12, 100
    %v14 = vpop.permute.xlu0 %13
    %vm15 = vcmask 900896
    %16 = vst.msk [vmem:[#allocation0] sm:$0x1] %vm15, %v14
    %s17 = scalar_lea.vmem %s0, 9
    %v18 = vld [vmem:[%s17] sm:$0x1]
    %19 = vrot.lane.b32.xlu0 %v18, 90
    %v20 = vpop.permute.xlu0 %19
    %vm21 = vcmask 818896
    %22 = vst.msk [vmem:[#allocation0] sm:$0x1] %vm21, %v20
    %s23 = scalar_lea.vmem %s0, 8
    %v24 = vld [vmem:[%s23] sm:$0x1]
    %25 = vrot.lane.b32.xlu0 %v24, 80
    %v26 = vpop.permute.xlu0 %25
    %vm27 = vcmask 736896
    %28 = vst.msk [vmem:[#allocation0] sm:$0x1] %vm27, %v26
    %s29 = scalar_lea.vmem %s0, 7
    %v30 = vld [vmem:[%s29] sm:$0x1]
    %31 = vrot.lane.b32.xlu0 %v30, 70
    %v32 = vpop.permute.xlu0 %31
    %vm33 = vcmask 654896
    %34 = vst.msk [vmem:[#allocation0] sm:$0x1] %vm33, %v32
    %s35 = scalar_lea.vmem %s0, 6
    %v36 = vld [vmem:[%s35] sm:$0x1]
    %37 = vrot.lane.b32.xlu0 %v36, 60
    %v38 = vpop.permute.xlu0 %37
    %vm39 = vcmask 572896
    %40 = vst.msk [vmem:[#allocation0] sm:$0x1] %vm39, %v38
    %s41 = scalar_lea.vmem %s0, 5
    %v42 = vld [vmem:[%s41] sm:$0x1]
    %43 = vrot.lane.b32.xlu0 %v42, 50
    %v44 = vpop.permute.xlu0 %43
    %vm45 = vcmask 490896
    %46 = vst.msk [vmem:[#allocation0] sm:$0x1] %vm45, %v44
    %s47 = scalar_lea.vmem %s0, 4
    %v48 = vld [vmem:[%s47] sm:$0x1]
    %49 = vrot.lane.b32.xlu0 %v48, 40
    %v50 = vpop.permute.xlu0 %49
    %vm51 = vcmask 408896
    %52 = vst.msk [vmem:[#allocation0] sm:$0x1] %vm51, %v50
    %s53 = scalar_lea.vmem %s0, 3
    %v54 = vld [vmem:[%s53] sm:$0x1]
    %55 = vrot.lane.b32.xlu0 %v54, 30
    %v56 = vpop.permute.xlu0 %55
    %vm57 = vcmask 326896
    %58 = vst.msk [vmem:[#allocation0] sm:$0x1] %vm57, %v56
    %s59 = scalar_lea.vmem %s0, 2
    %v60 = vld [vmem:[%s59] sm:$0x1]
    %61 = vrot.lane.b32.xlu0 %v60, 20
    %v62 = vpop.permute.xlu0 %61
    %vm63 = vcmask 244896
    %64 = vst.msk [vmem:[#allocation0] sm:$0x1] %vm63, %v62
    %s65 = scalar_lea.vmem %s0, 1
    %v66 = vld [vmem:[%s65] sm:$0x1]
    %67 = vrot.lane.b32.xlu0 %v66, 10
    %v68 = vpop.permute.xlu0 %67
    %vm69 = vcmask 162896
    %70 = vst.msk [vmem:[#allocation0] sm:$0x1] %vm69, %v68
    %s72 = sshllo.u32 0, 1
    %v74 = vld [vmem:[#allocation0] sm:%s72]
    %s75 = sshllo.u32 0, 1
    %76 = vst [vmem:[%s1] sm:%s75] %v74

// kernel: tile.18
$region0: #{tile.18}
  #allocation0 [shape = 's32[1]{0}', space=sflag, size = 0x4, scoped, tag = 'scoped memory for tile.18']
  %s0 = inlined_call_operand.vmem [shape: f32[20], index: 0, kind: input, shape index: {}]
  %s1 = inlined_call_operand.vmem [shape: f32[4,20], index: 1, kind: output, shape index: {}]
  // Predicated region
  $region2: #{tile.18} parent=0 // pred_check
    _
  $region3: #{tile.18} parent=0 // pred_check_branch
    %3 = sbr.rel (0) target = $region5
  $region4: #{tile.18} parent=0 // pred_region
    _
  $region5: #{tile.18} parent=0 // pred_fallthru
    _
  %v4 = vld [vmem:[%s0] ss:$0 sm:$0xff]
  %5 = vst [vmem:[%s1] sm:$0xf] %v4

// kernel: tile.19
$region0: #{tile.19}
  %s0 = inlined_call_operand.vmem [shape: f32[4,20], index: 0, kind: input, shape index: {}]
  %s1 = inlined_call_operand.vmem [shape: f32[80], index: 1, kind: output, shape index: {}]
  $region1: #{tile.19} parent=0
    #allocation0 [shape = 'u8[4096]{0}', space=vmem, size = 0x1000, scoped, tag = 'scoped mem for output reshape']
    #allocation1 [shape = 'u8[4096]{0}', space=vmem, size = 0x1000, scoped, tag = 'scoped mem for input reshape']
    %s3 = sshllo.u32 0, 4
    %v4 = vld [vmem:[%s0] sm:%s3]
    %5 = vst [vmem:[#allocation1] sm:%s3] %v4
    %v6 = vld [vmem:[#allocation1] sm:$0x1]
    %vm7 = vcmask 162816
    %8 = vst.msk [vmem:[#allocation0] sm:$0x1] %vm7, %v6
    %s9 = scalar_lea.vmem [#allocation1], 3
    %v10 = vld [vmem:[%s9] sm:$0x1]
    %11 = vrot.lane.b32.xlu0 %v10, 60
    %v12 = vpop.permute.xlu0 %11
    %vm13 = vcmask 654816
    %14 = vst.msk [vmem:[#allocation0] sm:$0x1] %vm13, %v12
    %s15 = scalar_lea.vmem [#allocation1], 2
    %v16 = vld [vmem:[%s15] sm:$0x1]
    %17 = vrot.lane.b32.xlu0 %v16, 40
    %v18 = vpop.permute.xlu0 %17
    %vm19 = vcmask 490816
    %20 = vst.msk [vmem:[#allocation0] sm:$0x1] %vm19, %v18
    %s21 = scalar_lea.vmem [#allocation1], 1
    %v22 = vld [vmem:[%s21] sm:$0x1]
    %23 = vrot.lane.b32.xlu0 %v22, 20
    %v24 = vpop.permute.xlu0 %23
    %vm25 = vcmask 326816
    %26 = vst.msk [vmem:[#allocation0] sm:$0x1] %vm25, %v24
    %s28 = sshllo.u32 0, 1
    %v30 = vld [vmem:[#allocation0] sm:%s28]
    %s31 = sshllo.u32 0, 1
    %32 = vst [vmem:[%s1] sm:%s31] %v30

// kernel: single_network_forward.1
$region0: #{single_network_forward.1}
  #allocation0 [shape = 'u32[]', space=smem, size = 0x4, offset = 0x4, fixed_abs, tag = 'smem constant byte address 0x4 - core index']
  #allocation1 [shape = 'u32[144,128]{1,0:T(1,128)}', space=vmem, size = 0x12000, scoped, tag = 'internal scratch']
  %s0 = inlined_call_operand.vmem [shape: f32[28,8,28], index: 0, kind: input, shape index: {}]
  %s1 = inlined_call_operand.vmem [shape: f32[140,256], index: 1, kind: input, shape index: {}]
  %s2 = inlined_call_operand.vmem [shape: f32[1,256], index: 2, kind: input, shape index: {}]
  %s3 = inlined_call_operand.vmem [shape: f32[5,128,256], index: 3, kind: input, shape index: {}]
  %s4 = inlined_call_operand.vmem [shape: f32[1,256], index: 4, kind: input, shape index: {}]
  %s5 = inlined_call_operand.vmem [shape: f32[4,128,50], index: 5, kind: input, shape index: {}]
  %s6 = inlined_call_operand.vmem [shape: f32[1,50], index: 6, kind: input, shape index: {}]
  %s7 = inlined_call_operand.vmem [shape: f32[50,128], index: 7, kind: input, shape index: {}]
  %s8 = inlined_call_operand.vmem [shape: f32[1,128], index: 8, kind: input, shape index: {}]
  %s9 = inlined_call_operand.vmem [shape: f32[8,128], index: 9, kind: output, shape index: {}]
  %s10 = sld [smem:[#allocation0]]
  $region46: #{single_network_forward.1} parent=0
    _
  %s12 = ssub.s32 1, %s10
  %s13 = scalar_select 0, %s12, %s10
  // Predicated region
  $region2: #{single_network_forward.1} parent=0 // pred_check
    _
  $region3: #{single_network_forward.1} parent=0 // pred_check_branch
    %15 = sbr.rel (0) target = $region5
  $region4: #{single_network_forward.1} parent=0 // pred_region
    _
  $region5: #{single_network_forward.1} parent=0 // pred_fallthru
    _
  // Predicated region
  $region6: #{single_network_forward.1} parent=0 // pred_check
    _
  $region7: #{single_network_forward.1} parent=0 // pred_check_branch
    %17 = sbr.rel (0) target = $region9
  $region8: #{single_network_forward.1} parent=0 // pred_region
    _
  $region9: #{single_network_forward.1} parent=0 // pred_fallthru
    _
  // Predicated region
  $region10: #{single_network_forward.1} parent=0 // pred_check
    _
  $region11: #{single_network_forward.1} parent=0 // pred_check_branch
    %19 = sbr.rel (0) target = $region13
  $region12: #{single_network_forward.1} parent=0 // pred_region
    _
  $region13: #{single_network_forward.1} parent=0 // pred_fallthru
    _
  // Predicated region
  $region14: #{single_network_forward.1} parent=0 // pred_check
    _
  $region15: #{single_network_forward.1} parent=0 // pred_check_branch
    %21 = sbr.rel (0) target = $region17
  $region16: #{single_network_forward.1} parent=0 // pred_region
    _
  $region17: #{single_network_forward.1} parent=0 // pred_fallthru
    _
  // Predicated region
  $region18: #{single_network_forward.1} parent=0 // pred_check
    _
  $region19: #{single_network_forward.1} parent=0 // pred_check_branch
    %23 = sbr.rel (0) target = $region21
  $region20: #{single_network_forward.1} parent=0 // pred_region
    _
  $region21: #{single_network_forward.1} parent=0 // pred_fallthru
    _
  // Predicated region
  $region22: #{single_network_forward.1} parent=0 // pred_check
    _
  $region23: #{single_network_forward.1} parent=0 // pred_check_branch
    %25 = sbr.rel (0) target = $region25
  $region24: #{single_network_forward.1} parent=0 // pred_region
    _
  $region25: #{single_network_forward.1} parent=0 // pred_fallthru
    _
  // Predicated region
  $region26: #{single_network_forward.1} parent=0 // pred_check
    _
  $region27: #{single_network_forward.1} parent=0 // pred_check_branch
    %27 = sbr.rel (0) target = $region29
  $region28: #{single_network_forward.1} parent=0 // pred_region
    _
  $region29: #{single_network_forward.1} parent=0 // pred_fallthru
    _
  // Predicated region
  $region30: #{single_network_forward.1} parent=0 // pred_check
    _
  $region31: #{single_network_forward.1} parent=0 // pred_check_branch
    %29 = sbr.rel (0) target = $region33
  $region32: #{single_network_forward.1} parent=0 // pred_region
    _
  $region33: #{single_network_forward.1} parent=0 // pred_fallthru
    _
  // Predicated region
  $region34: #{single_network_forward.1} parent=0 // pred_check
    _
  $region35: #{single_network_forward.1} parent=0 // pred_check_branch
    %31 = sbr.rel (0) target = $region37
  $region36: #{single_network_forward.1} parent=0 // pred_region
    _
  $region37: #{single_network_forward.1} parent=0 // pred_fallthru
    _
  %v32 = vld [vmem:[%s0] sm:$0xff]
  %v33 = vld [vmem:[%s0 + $0x8] sm:$0xff]
  %v34 = vld [vmem:[%s0 + $0x10] sm:$0xff]
  %v35 = vld [vmem:[%s0 + $0x18] sm:$0xff]
  %v36 = vld [vmem:[%s0 + $0x20] sm:$0xff]
  %v37 = vld [vmem:[%s0 + $0x28] sm:$0xff]
  %v38 = vld [vmem:[%s0 + $0x30] sm:$0xff]
  %v39 = vld [vmem:[%s0 + $0x38] sm:$0xff]
  %v40 = vld [vmem:[%s0 + $0x40] sm:$0xff]
  %v41 = vld [vmem:[%s0 + $0x48] sm:$0xff]
  %v42 = vld [vmem:[%s0 + $0x50] sm:$0xff]
  %v43 = vld [vmem:[%s0 + $0x58] sm:$0xff]
  %v44 = vld [vmem:[%s0 + $0x60] sm:$0xff]
  %v45 = vld [vmem:[%s0 + $0x68] sm:$0xff]
  %v46 = vld [vmem:[%s0 + $0x70] sm:$0xff]
  %v47 = vld [vmem:[%s0 + $0x78] sm:$0xff]
  %v48 = vld [vmem:[%s0 + $0x80] sm:$0xff]
  %v49 = vld [vmem:[%s0 + $0x88] sm:$0xff]
  %v50 = vld [vmem:[%s0 + $0x90] sm:$0xff]
  %v51 = vld [vmem:[%s0 + $0x98] sm:$0xff]
  %v52 = vld [vmem:[%s0 + $0xa0] sm:$0xff]
  %v53 = vld [vmem:[%s0 + $0xa8] sm:$0xff]
  %v54 = vld [vmem:[%s0 + $0xb0] sm:$0xff]
  %v55 = vld [vmem:[%s0 + $0xb8] sm:$0xff]
  %v56 = vld [vmem:[%s0 + $0xc0] sm:$0xff]
  %v57 = vld [vmem:[%s0 + $0xc8] sm:$0xff]
  %v58 = vld [vmem:[%s0 + $0xd0] sm:$0xff]
  %v59 = vld [vmem:[%s0 + $0xd8] sm:$0xff]
  %84 = vrot.lane.b32.xlu0 %v33, 28
  %v85 = vpop.permute.xlu0 %84
  %86 = vrot.lane.b32.xlu0 %v34, 28
  %v87 = vpop.permute.xlu0 %86
  %88 = vrot.lane.b32.xlu0 %v35, 28
  %v89 = vpop.permute.xlu0 %88
  %90 = vrot.lane.b32.xlu0 %v36, 28
  %v91 = vpop.permute.xlu0 %90
  %92 = vrot.lane.b32.xlu0 %v37, 28
  %v93 = vpop.permute.xlu0 %92
  %94 = vrot.lane.b32.xlu0 %v38, 28
  %v95 = vpop.permute.xlu0 %94
  %96 = vrot.lane.b32.xlu0 %v39, 28
  %v97 = vpop.permute.xlu0 %96
  %98 = vrot.lane.b32.xlu0 %v40, 28
  %v99 = vpop.permute.xlu0 %98
  %100 = vrot.lane.b32.xlu0 %v41, 28
  %v101 = vpop.permute.xlu0 %100
  %102 = vrot.lane.b32.xlu0 %v42, 28
  %v103 = vpop.permute.xlu0 %102
  %104 = vrot.lane.b32.xlu0 %v43, 28
  %v105 = vpop.permute.xlu0 %104
  %106 = vrot.lane.b32.xlu0 %v44, 28
  %v107 = vpop.permute.xlu0 %106
  %108 = vrot.lane.b32.xlu0 %v45, 28
  %v109 = vpop.permute.xlu0 %108
  %110 = vrot.lane.b32.xlu0 %v46, 28
  %v111 = vpop.permute.xlu0 %110
  %112 = vrot.lane.b32.xlu0 %v47, 28
  %v113 = vpop.permute.xlu0 %112
  %114 = vrot.lane.b32.xlu0 %v48, 28
  %v115 = vpop.permute.xlu0 %114
  %116 = vrot.lane.b32.xlu0 %v49, 28
  %v117 = vpop.permute.xlu0 %116
  %118 = vrot.lane.b32.xlu0 %v50, 28
  %v119 = vpop.permute.xlu0 %118
  %120 = vrot.lane.b32.xlu0 %v51, 28
  %v121 = vpop.permute.xlu0 %120
  %122 = vrot.lane.b32.xlu0 %v52, 28
  %v123 = vpop.permute.xlu0 %122
  %124 = vrot.lane.b32.xlu0 %v53, 28
  %v125 = vpop.permute.xlu0 %124
  %126 = vrot.lane.b32.xlu0 %v54, 28
  %v127 = vpop.permute.xlu0 %126
  %128 = vrot.lane.b32.xlu0 %v55, 28
  %v129 = vpop.permute.xlu0 %128
  %130 = vrot.lane.b32.xlu0 %v56, 28
  %v131 = vpop.permute.xlu0 %130
  %157 = vrot.lane.b32.xlu0 %v34, 56
  %v158 = vpop.permute.xlu0 %157
  %159 = vrot.lane.b32.xlu0 %v35, 56
  %v160 = vpop.permute.xlu0 %159
  %161 = vrot.lane.b32.xlu0 %v36, 56
  %v162 = vpop.permute.xlu0 %161
  %163 = vrot.lane.b32.xlu0 %v37, 56
  %v164 = vpop.permute.xlu0 %163
  %165 = vrot.lane.b32.xlu0 %v38, 56
  %v166 = vpop.permute.xlu0 %165
  %167 = vrot.lane.b32.xlu0 %v39, 56
  %v168 = vpop.permute.xlu0 %167
  %169 = vrot.lane.b32.xlu0 %v40, 56
  %v170 = vpop.permute.xlu0 %169
  %171 = vrot.lane.b32.xlu0 %v41, 56
  %v172 = vpop.permute.xlu0 %171
  %173 = vrot.lane.b32.xlu0 %v42, 56
  %v174 = vpop.permute.xlu0 %173
  %175 = vrot.lane.b32.xlu0 %v43, 56
  %v176 = vpop.permute.xlu0 %175
  %177 = vrot.lane.b32.xlu0 %v44, 56
  %v178 = vpop.permute.xlu0 %177
  %179 = vrot.lane.b32.xlu0 %v45, 56
  %v180 = vpop.permute.xlu0 %179
  %181 = vrot.lane.b32.xlu0 %v46, 56
  %v182 = vpop.permute.xlu0 %181
  %183 = vrot.lane.b32.xlu0 %v47, 56
  %v184 = vpop.permute.xlu0 %183
  %185 = vrot.lane.b32.xlu0 %v48, 56
  %v186 = vpop.permute.xlu0 %185
  %187 = vrot.lane.b32.xlu0 %v49, 56
  %v188 = vpop.permute.xlu0 %187
  %189 = vrot.lane.b32.xlu0 %v50, 56
  %v190 = vpop.permute.xlu0 %189
  %191 = vrot.lane.b32.xlu0 %v51, 56
  %v192 = vpop.permute.xlu0 %191
  %193 = vrot.lane.b32.xlu0 %v52, 56
  %v194 = vpop.permute.xlu0 %193
  %195 = vrot.lane.b32.xlu0 %v53, 56
  %v196 = vpop.permute.xlu0 %195
  %197 = vrot.lane.b32.xlu0 %v54, 56
  %v198 = vpop.permute.xlu0 %197
  %199 = vrot.lane.b32.xlu0 %v55, 56
  %v200 = vpop.permute.xlu0 %199
  %201 = vrot.lane.b32.xlu0 %v56, 56
  %v202 = vpop.permute.xlu0 %201
  %203 = vrot.lane.b32.xlu0 %v57, 56
  %v204 = vpop.permute.xlu0 %203
  %230 = vrot.lane.b32.xlu0 %v35, 84
  %v231 = vpop.permute.xlu0 %230
  %232 = vrot.lane.b32.xlu0 %v36, 84
  %v233 = vpop.permute.xlu0 %232
  %234 = vrot.lane.b32.xlu0 %v37, 84
  %v235 = vpop.permute.xlu0 %234
  %236 = vrot.lane.b32.xlu0 %v38, 84
  %v237 = vpop.permute.xlu0 %236
  %238 = vrot.lane.b32.xlu0 %v39, 84
  %v239 = vpop.permute.xlu0 %238
  %240 = vrot.lane.b32.xlu0 %v40, 84
  %v241 = vpop.permute.xlu0 %240
  %242 = vrot.lane.b32.xlu0 %v41, 84
  %v243 = vpop.permute.xlu0 %242
  %244 = vrot.lane.b32.xlu0 %v42, 84
  %v245 = vpop.permute.xlu0 %244
  %246 = vrot.lane.b32.xlu0 %v43, 84
  %v247 = vpop.permute.xlu0 %246
  %248 = vrot.lane.b32.xlu0 %v44, 84
  %v249 = vpop.permute.xlu0 %248
  %250 = vrot.lane.b32.xlu0 %v45, 84
  %v251 = vpop.permute.xlu0 %250
  %252 = vrot.lane.b32.xlu0 %v46, 84
  %v253 = vpop.permute.xlu0 %252
  %254 = vrot.lane.b32.xlu0 %v47, 84
  %v255 = vpop.permute.xlu0 %254
  %256 = vrot.lane.b32.xlu0 %v48, 84
  %v257 = vpop.permute.xlu0 %256
  %258 = vrot.lane.b32.xlu0 %v49, 84
  %v259 = vpop.permute.xlu0 %258
  %260 = vrot.lane.b32.xlu0 %v50, 84
  %v261 = vpop.permute.xlu0 %260
  %262 = vrot.lane.b32.xlu0 %v51, 84
  %v263 = vpop.permute.xlu0 %262
  %264 = vrot.lane.b32.xlu0 %v52, 84
  %v265 = vpop.permute.xlu0 %264
  %266 = vrot.lane.b32.xlu0 %v53, 84
  %v267 = vpop.permute.xlu0 %266
  %268 = vrot.lane.b32.xlu0 %v54, 84
  %v269 = vpop.permute.xlu0 %268
  %270 = vrot.lane.b32.xlu0 %v55, 84
  %v271 = vpop.permute.xlu0 %270
  %272 = vrot.lane.b32.xlu0 %v56, 84
  %v273 = vpop.permute.xlu0 %272
  %274 = vrot.lane.b32.xlu0 %v57, 84
  %v275 = vpop.permute.xlu0 %274
  %276 = vrot.lane.b32.xlu0 %v58, 84
  %v277 = vpop.permute.xlu0 %276
  %303 = vrot.lane.b32.xlu0 %v36, 112
  %v304 = vpop.permute.xlu0 %303
  %305 = vrot.lane.b32.xlu0 %v37, 112
  %v306 = vpop.permute.xlu0 %305
  %307 = vrot.lane.b32.xlu0 %v38, 112
  %v308 = vpop.permute.xlu0 %307
  %309 = vrot.lane.b32.xlu0 %v39, 112
  %v310 = vpop.permute.xlu0 %309
  %311 = vrot.lane.b32.xlu0 %v40, 112
  %v312 = vpop.permute.xlu0 %311
  %313 = vrot.lane.b32.xlu0 %v41, 112
  %v314 = vpop.permute.xlu0 %313
  %315 = vrot.lane.b32.xlu0 %v42, 112
  %v316 = vpop.permute.xlu0 %315
  %317 = vrot.lane.b32.xlu0 %v43, 112
  %v318 = vpop.permute.xlu0 %317
  %319 = vrot.lane.b32.xlu0 %v44, 112
  %v320 = vpop.permute.xlu0 %319
  %321 = vrot.lane.b32.xlu0 %v45, 112
  %v322 = vpop.permute.xlu0 %321
  %323 = vrot.lane.b32.xlu0 %v46, 112
  %v324 = vpop.permute.xlu0 %323
  %325 = vrot.lane.b32.xlu0 %v47, 112
  %v326 = vpop.permute.xlu0 %325
  %327 = vrot.lane.b32.xlu0 %v48, 112
  %v328 = vpop.permute.xlu0 %327
  %329 = vrot.lane.b32.xlu0 %v49, 112
  %v330 = vpop.permute.xlu0 %329
  %331 = vrot.lane.b32.xlu0 %v50, 112
  %v332 = vpop.permute.xlu0 %331
  %333 = vrot.lane.b32.xlu0 %v51, 112
  %v334 = vpop.permute.xlu0 %333
  %335 = vrot.lane.b32.xlu0 %v52, 112
  %v336 = vpop.permute.xlu0 %335
  %337 = vrot.lane.b32.xlu0 %v53, 112
  %v338 = vpop.permute.xlu0 %337
  %339 = vrot.lane.b32.xlu0 %v54, 112
  %v340 = vpop.permute.xlu0 %339
  %341 = vrot.lane.b32.xlu0 %v55, 112
  %v342 = vpop.permute.xlu0 %341
  %343 = vrot.lane.b32.xlu0 %v56, 112
  %v344 = vpop.permute.xlu0 %343
  %345 = vrot.lane.b32.xlu0 %v57, 112
  %v346 = vpop.permute.xlu0 %345
  %347 = vrot.lane.b32.xlu0 %v58, 112
  %v348 = vpop.permute.xlu0 %347
  %349 = vrot.lane.b32.xlu0 %v59, 112
  %v350 = vpop.permute.xlu0 %349
  %vm375 = vcmask 228352
  %v376 = vsel %vm375, %v32, %v85
  %v377 = vsel %vm375, %v33, %v87
  %v378 = vsel %vm375, %v34, %v89
  %v379 = vsel %vm375, %v35, %v91
  %v380 = vsel %vm375, %v36, %v93
  %v381 = vsel %vm375, %v37, %v95
  %v382 = vsel %vm375, %v38, %v97
  %v383 = vsel %vm375, %v39, %v99
  %v384 = vsel %vm375, %v40, %v101
  %v385 = vsel %vm375, %v41, %v103
  %v386 = vsel %vm375, %v42, %v105
  %v387 = vsel %vm375, %v43, %v107
  %v388 = vsel %vm375, %v44, %v109
  %v389 = vsel %vm375, %v45, %v111
  %v390 = vsel %vm375, %v46, %v113
  %v391 = vsel %vm375, %v47, %v115
  %v392 = vsel %vm375, %v48, %v117
  %v393 = vsel %vm375, %v49, %v119
  %v394 = vsel %vm375, %v50, %v121
  %v395 = vsel %vm375, %v51, %v123
  %v396 = vsel %vm375, %v52, %v125
  %v397 = vsel %vm375, %v53, %v127
  %v398 = vsel %vm375, %v54, %v129
  %v399 = vsel %vm375, %v55, %v131
  %vm400 = vcmask 457728
  %v401 = vsel %vm400, %v376, %v158
  %v402 = vsel %vm400, %v377, %v160
  %v403 = vsel %vm400, %v378, %v162
  %v404 = vsel %vm400, %v379, %v164
  %v405 = vsel %vm400, %v380, %v166
  %v406 = vsel %vm400, %v381, %v168
  %v407 = vsel %vm400, %v382, %v170
  %v408 = vsel %vm400, %v383, %v172
  %v409 = vsel %vm400, %v384, %v174
  %v410 = vsel %vm400, %v385, %v176
  %v411 = vsel %vm400, %v386, %v178
  %v412 = vsel %vm400, %v387, %v180
  %v413 = vsel %vm400, %v388, %v182
  %v414 = vsel %vm400, %v389, %v184
  %v415 = vsel %vm400, %v390, %v186
  %v416 = vsel %vm400, %v391, %v188
  %v417 = vsel %vm400, %v392, %v190
  %v418 = vsel %vm400, %v393, %v192
  %v419 = vsel %vm400, %v394, %v194
  %v420 = vsel %vm400, %v395, %v196
  %v421 = vsel %vm400, %v396, %v198
  %v422 = vsel %vm400, %v397, %v200
  %v423 = vsel %vm400, %v398, %v202
  %v424 = vsel %vm400, %v399, %v204
  %vm425 = vcmask 687104
  %v426 = vsel %vm425, %v401, %v231
  %v427 = vsel %vm425, %v402, %v233
  %v428 = vsel %vm425, %v403, %v235
  %v429 = vsel %vm425, %v404, %v237
  %v430 = vsel %vm425, %v405, %v239
  %v431 = vsel %vm425, %v406, %v241
  %v432 = vsel %vm425, %v407, %v243
  %v433 = vsel %vm425, %v408, %v245
  %v434 = vsel %vm425, %v409, %v247
  %v435 = vsel %vm425, %v410, %v249
  %v436 = vsel %vm425, %v411, %v251
  %v437 = vsel %vm425, %v412, %v253
  %v438 = vsel %vm425, %v413, %v255
  %v439 = vsel %vm425, %v414, %v257
  %v440 = vsel %vm425, %v415, %v259
  %v441 = vsel %vm425, %v416, %v261
  %v442 = vsel %vm425, %v417, %v263
  %v443 = vsel %vm425, %v418, %v265
  %v444 = vsel %vm425, %v419, %v267
  %v445 = vsel %vm425, %v420, %v269
  %v446 = vsel %vm425, %v421, %v271
  %v447 = vsel %vm425, %v422, %v273
  %v448 = vsel %vm425, %v423, %v275
  %v449 = vsel %vm425, %v424, %v277
  %vm450 = vcmask 916480
  %v451 = vsel %vm450, %v426, %v304
  %v452 = vsel %vm450, %v427, %v306
  %v453 = vsel %vm450, %v428, %v308
  %v454 = vsel %vm450, %v429, %v310
  %v455 = vsel %vm450, %v430, %v312
  %v456 = vsel %vm450, %v431, %v314
  %v457 = vsel %vm450, %v432, %v316
  %v458 = vsel %vm450, %v433, %v318
  %v459 = vsel %vm450, %v434, %v320
  %v460 = vsel %vm450, %v435, %v322
  %v461 = vsel %vm450, %v436, %v324
  %v462 = vsel %vm450, %v437, %v326
  %v463 = vsel %vm450, %v438, %v328
  %v464 = vsel %vm450, %v439, %v330
  %v465 = vsel %vm450, %v440, %v332
  %v466 = vsel %vm450, %v441, %v334
  %v467 = vsel %vm450, %v442, %v336
  %v468 = vsel %vm450, %v443, %v338
  %v469 = vsel %vm450, %v444, %v340
  %v470 = vsel %vm450, %v445, %v342
  %v471 = vsel %vm450, %v446, %v344
  %v472 = vsel %vm450, %v447, %v346
  %v473 = vsel %vm450, %v448, %v348
  %v474 = vsel %vm450, %v449, %v350
  %v475 = vld [vmem:[%s1] sm:$0xff]
  %v476 = vld [vmem:[%s1 + $0x8] sm:$0xff]
  %v477 = vld [vmem:[%s1 + $0x10] sm:$0xff]
  %v478 = vld [vmem:[%s1 + $0x18] sm:$0xff]
  %v479 = vld [vmem:[%s1 + $0x20] sm:$0xff]
  %v480 = vld [vmem:[%s1 + $0x28] sm:$0xff]
  %v481 = vld [vmem:[%s1 + $0x30] sm:$0xff]
  %v482 = vld [vmem:[%s1 + $0x38] sm:$0xff]
  %v483 = vld [vmem:[%s1 + $0x40] sm:$0xff]
  %v484 = vld [vmem:[%s1 + $0x48] sm:$0xff]
  %v485 = vld [vmem:[%s1 + $0x50] sm:$0xff]
  %v486 = vld [vmem:[%s1 + $0x58] sm:$0xff]
  %v487 = vld [vmem:[%s1 + $0x60] sm:$0xff]
  %v488 = vld [vmem:[%s1 + $0x68] sm:$0xff]
  %v489 = vld [vmem:[%s1 + $0x70] sm:$0xff]
  %v490 = vld [vmem:[%s1 + $0x78] sm:$0xff]
  %v491 = vld [vmem:[%s1 + $0x80] sm:$0xff]
  %v492 = vld [vmem:[%s1 + $0x88] sm:$0xff]
  %v493 = vld [vmem:[%s1 + $0x90] sm:$0xff]
  %v494 = vld [vmem:[%s1 + $0x98] sm:$0xff]
  %v495 = vld [vmem:[%s1 + $0xa0] sm:$0xff]
  %v496 = vld [vmem:[%s1 + $0xa8] sm:$0xff]
  %v497 = vld [vmem:[%s1 + $0xb0] sm:$0xff]
  %v498 = vld [vmem:[%s1 + $0xb8] sm:$0xff]
  %v499 = vld [vmem:[%s1 + $0xc0] sm:$0xff]
  %v500 = vld [vmem:[%s1 + $0xc8] sm:$0xff]
  %v501 = vld [vmem:[%s1 + $0xd0] sm:$0xff]
  %v502 = vld [vmem:[%s1 + $0xd8] sm:$0xff]
  %v503 = vld [vmem:[%s1 + $0xe0] sm:$0xff]
  %v504 = vld [vmem:[%s1 + $0xe8] sm:$0xff]
  %v505 = vld [vmem:[%s1 + $0xf0] sm:$0xff]
  %v506 = vld [vmem:[%s1 + $0xf8] sm:$0xff]
  %v507 = vld [vmem:[%s1 + $0x100] sm:$0xff]
  %v508 = vld [vmem:[%s1 + $0x108] sm:$0xff]
  %v509 = vld [vmem:[%s1 + $0x110] sm:$0xf]
  %v510 = vld [vmem:[%s1 + $0x118] sm:$0xf]
  %v511 = vld [vmem:[%s2] sm:$0x3]
  %v513 = vlaneseq
  %v514 = vshrl.u32 %v513, 7
  %v515 = vsub.s32 0, %v514
  %v516 = vrot.slane %v511, %v515
  %v517 = vlaneseq
  %v518 = vshrl.u32 %v517, 7
  %v519 = vsub.s32 1, %v518
  %v520 = vrot.slane %v511, %v519
  %vm523 = vcmask 97280
  %v524 = vsel %vm523, %v304, 0
  %v526 = vsel %vm523, %v306, 0
  %v528 = vsel %vm523, %v308, 0
  %v530 = vsel %vm523, %v310, 0
  %v532 = vsel %vm523, %v312, 0
  %v534 = vsel %vm523, %v314, 0
  %v536 = vsel %vm523, %v316, 0
  %v538 = vsel %vm523, %v318, 0
  %v540 = vsel %vm523, %v320, 0
  %v542 = vsel %vm523, %v322, 0
  %v544 = vsel %vm523, %v324, 0
  %v546 = vsel %vm523, %v326, 0
  %v548 = vsel %vm523, %v328, 0
  %v550 = vsel %vm523, %v330, 0
  %v552 = vsel %vm523, %v332, 0
  %v554 = vsel %vm523, %v334, 0
  %v556 = vsel %vm523, %v336, 0
  %v558 = vsel %vm523, %v338, 0
  %v560 = vsel %vm523, %v340, 0
  %v562 = vsel %vm523, %v342, 0
  %v564 = vsel %vm523, %v344, 0
  %v566 = vsel %vm523, %v346, 0
  %v568 = vsel %vm523, %v348, 0
  %v570 = vsel %vm523, %v350, 0
  %vm572 = vcmask 1043456
  %v574 = vsel %vm572, %v509, 0
  %v577 = vsel %vm572, %v510, 0
  %579 = vmatprep.subr.mxu0 %v476
  %580 = vmatpush1.msra.mxu0 %v475
  %581 = vmatprep.subr.mxu0 %v478
  %582 = vmatpush1.msra.mxu0 %v477
  %583 = vmatprep.subr.mxu0 %v480
  %584 = vmatpush1.msra.mxu0 %v479
  %585 = vmatprep.subr.mxu0 %v482
  %586 = vmatpush1.msra.mxu0 %v481
  %587 = vmatprep.subr.mxu0 %v484
  %588 = vmatpush1.msra.mxu0 %v483
  %589 = vmatprep.subr.mxu0 %v486
  %590 = vmatpush1.msra.mxu0 %v485
  %591 = vmatprep.subr.mxu0 %v488
  %592 = vmatpush1.msra.mxu0 %v487
  %593 = vmatprep.subr.mxu0 %v490
  %594 = vmatpush1.msra.mxu0 %v489
  %595 = vmatprep.subr.mxu0 %v492
  %596 = vmatpush1.msra.mxu0 %v491
  %597 = vmatprep.subr.mxu0 %v494
  %598 = vmatpush1.msra.mxu0 %v493
  %599 = vmatprep.subr.mxu0 %v496
  %600 = vmatpush1.msra.mxu0 %v495
  %601 = vmatprep.subr.mxu0 %v498
  %602 = vmatpush1.msra.mxu0 %v497
  %603 = vmatprep.subr.mxu0 %v500
  %604 = vmatpush1.msra.mxu0 %v499
  %605 = vmatprep.subr.mxu0 %v502
  %606 = vmatpush1.msra.mxu0 %v501
  %607 = vmatprep.subr.mxu0 %v504
  %608 = vmatpush1.msra.mxu0 %v503
  %609 = vmatprep.subr.mxu0 %v506
  %610 = vmatpush1.msra.mxu0 %v505
  %611 = vmatprep.subr.mxu0 %v508
  %612 = vmatpush1.msra.mxu0 %v507
  %613 = vmatprep.subr.mxu0 %v577
  %614 = vmatpush1.msra.mxu0 %v574
  %615 = vmatprep.subr.mxu0 0.0
  %616 = vmatpush1.msra.mxu0 0.0
  %617 = vmatprep.subr.mxu0 0.0
  %618 = vmatpush1.msra.mxu0 0.0
  %619 = vmatprep.subr.mxu0 0.0
  %620 = vmatpush1.msra.mxu0 0.0
  %621 = vmatprep.subr.mxu0 0.0
  %622 = vmatpush1.msra.mxu0 0.0
  %623 = vmatprep.subr.mxu0 0.0
  %624 = vmatpush1.msra.mxu0 0.0
  %625 = vmatprep.subr.mxu0 0.0
  %626 = vmatpush1.msra.mxu0 0.0
  %627 = vmatprep.subr.mxu0 0.0
  %628 = vmatpush1.msra.mxu0 0.0
  %629 = vmatprep.subr.mxu0 0.0
  %630 = vmatpush1.msra.mxu0 0.0
  %631 = vmatprep.subr.mxu0 0.0
  %632 = vmatpush1.msra.mxu0 0.0
  %633 = vmatprep.subr.mxu0 0.0
  %634 = vmatpush1.msra.mxu0 0.0
  %635 = vmatprep.subr.mxu0 0.0
  %636 = vmatpush1.msra.mxu0 0.0
  %637 = vmatprep.subr.mxu0 0.0
  %638 = vmatpush1.msra.mxu0 0.0
  %639 = vmatprep.subr.mxu0 0.0
  %640 = vmatpush1.msra.mxu0 0.0
  %641 = vmatprep.subr.mxu0 0.0
  %642 = vmatpush1.msra.mxu0 0.0
  %643 = vmatprep.mubr.f32.mxu0 %v524
  %644 = vmatmul.mubr.f32.gmra.mrb[0].mxu0 %v451
  %v645 = vpop.f32.mrb[0].mxu0
  %v646 = vadd.f32 %v516, %v645
  %v647 = vpop.f32.mrb[0].mxu0
  %v648 = vadd.f32 %v520, %v647
  %649 = vmatprep.mubr.f32.mxu0 %v526
  %650 = vmatmul.mubr.f32.gmra.mrb[0].mxu0 %v452
  %v651 = vpop.f32.mrb[0].mxu0
  %v652 = vadd.f32 %v516, %v651
  %v653 = vpop.f32.mrb[0].mxu0
  %v654 = vadd.f32 %v520, %v653
  %655 = vmatprep.mubr.f32.mxu0 %v528
  %656 = vmatmul.mubr.f32.gmra.mrb[0].mxu0 %v453
  %v657 = vpop.f32.mrb[0].mxu0
  %v658 = vadd.f32 %v516, %v657
  %v659 = vpop.f32.mrb[0].mxu0
  %v660 = vadd.f32 %v520, %v659
  %661 = vmatprep.mubr.f32.mxu0 %v530
  %662 = vmatmul.mubr.f32.gmra.mrb[0].mxu0 %v454
  %v663 = vpop.f32.mrb[0].mxu0
  %v664 = vadd.f32 %v516, %v663
  %v665 = vpop.f32.mrb[0].mxu0
  %v666 = vadd.f32 %v520, %v665
  %667 = vmatprep.mubr.f32.mxu0 %v532
  %668 = vmatmul.mubr.f32.gmra.mrb[0].mxu0 %v455
  %v669 = vpop.f32.mrb[0].mxu0
  %v670 = vadd.f32 %v516, %v669
  %v671 = vpop.f32.mrb[0].mxu0
  %v672 = vadd.f32 %v520, %v671
  %673 = vmatprep.mubr.f32.mxu0 %v534
  %674 = vmatmul.mubr.f32.gmra.mrb[0].mxu0 %v456
  %v675 = vpop.f32.mrb[0].mxu0
  %v676 = vadd.f32 %v516, %v675
  %v677 = vpop.f32.mrb[0].mxu0
  %v678 = vadd.f32 %v520, %v677
  %679 = vmatprep.mubr.f32.mxu0 %v536
  %680 = vmatmul.mubr.f32.gmra.mrb[0].mxu0 %v457
  %v681 = vpop.f32.mrb[0].mxu0
  %v682 = vadd.f32 %v516, %v681
  %v683 = vpop.f32.mrb[0].mxu0
  %v684 = vadd.f32 %v520, %v683
  %685 = vmatprep.mubr.f32.mxu0 %v538
  %686 = vmatmul.mubr.f32.gmra.mrb[0].mxu0 %v458
  %v687 = vpop.f32.mrb[0].mxu0
  %v688 = vadd.f32 %v516, %v687
  %v689 = vpop.f32.mrb[0].mxu0
  %v690 = vadd.f32 %v520, %v689
  %691 = vmatprep.mubr.f32.mxu0 %v540
  %692 = vmatmul.mubr.f32.gmra.mrb[0].mxu0 %v459
  %v693 = vpop.f32.mrb[0].mxu0
  %v694 = vadd.f32 %v516, %v693
  %v695 = vpop.f32.mrb[0].mxu0
  %v696 = vadd.f32 %v520, %v695
  %697 = vmatprep.mubr.f32.mxu0 %v542
  %698 = vmatmul.mubr.f32.gmra.mrb[0].mxu0 %v460
  %v699 = vpop.f32.mrb[0].mxu0
  %v700 = vadd.f32 %v516, %v699
  %v701 = vpop.f32.mrb[0].mxu0
  %v702 = vadd.f32 %v520, %v701
  %703 = vmatprep.mubr.f32.mxu0 %v544
  %704 = vmatmul.mubr.f32.gmra.mrb[0].mxu0 %v461
  %v705 = vpop.f32.mrb[0].mxu0
  %v706 = vadd.f32 %v516, %v705
  %v707 = vpop.f32.mrb[0].mxu0
  %v708 = vadd.f32 %v520, %v707
  %709 = vmatprep.mubr.f32.mxu0 %v546
  %710 = vmatmul.mubr.f32.gmra.mrb[0].mxu0 %v462
  %v711 = vpop.f32.mrb[0].mxu0
  %v712 = vadd.f32 %v516, %v711
  %v713 = vpop.f32.mrb[0].mxu0
  %v714 = vadd.f32 %v520, %v713
  %715 = vmatprep.mubr.f32.mxu0 %v548
  %716 = vmatmul.mubr.f32.gmra.mrb[0].mxu0 %v463
  %v717 = vpop.f32.mrb[0].mxu0
  %v718 = vadd.f32 %v516, %v717
  %v719 = vpop.f32.mrb[0].mxu0
  %v720 = vadd.f32 %v520, %v719
  %721 = vmatprep.mubr.f32.mxu0 %v550
  %722 = vmatmul.mubr.f32.gmra.mrb[0].mxu0 %v464
  %v723 = vpop.f32.mrb[0].mxu0
  %v724 = vadd.f32 %v516, %v723
  %v725 = vpop.f32.mrb[0].mxu0
  %v726 = vadd.f32 %v520, %v725
  %727 = vmatprep.mubr.f32.mxu0 %v552
  %728 = vmatmul.mubr.f32.gmra.mrb[0].mxu0 %v465
  %v729 = vpop.f32.mrb[0].mxu0
  %v730 = vadd.f32 %v516, %v729
  %v731 = vpop.f32.mrb[0].mxu0
  %v732 = vadd.f32 %v520, %v731
  %733 = vmatprep.mubr.f32.mxu0 %v554
  %734 = vmatmul.mubr.f32.gmra.mrb[0].mxu0 %v466
  %v735 = vpop.f32.mrb[0].mxu0
  %v736 = vadd.f32 %v516, %v735
  %v737 = vpop.f32.mrb[0].mxu0
  %v738 = vadd.f32 %v520, %v737
  %739 = vmatprep.mubr.f32.mxu0 %v556
  %740 = vmatmul.mubr.f32.gmra.mrb[0].mxu0 %v467
  %v741 = vpop.f32.mrb[0].mxu0
  %v742 = vadd.f32 %v516, %v741
  %v743 = vpop.f32.mrb[0].mxu0
  %v744 = vadd.f32 %v520, %v743
  %745 = vmatprep.mubr.f32.mxu0 %v558
  %746 = vmatmul.mubr.f32.gmra.mrb[0].mxu0 %v468
  %v747 = vpop.f32.mrb[0].mxu0
  %v748 = vadd.f32 %v516, %v747
  %v749 = vpop.f32.mrb[0].mxu0
  %v750 = vadd.f32 %v520, %v749
  %751 = vmatprep.mubr.f32.mxu0 %v560
  %752 = vmatmul.mubr.f32.gmra.mrb[0].mxu0 %v469
  %v753 = vpop.f32.mrb[0].mxu0
  %v754 = vadd.f32 %v516, %v753
  %v755 = vpop.f32.mrb[0].mxu0
  %v756 = vadd.f32 %v520, %v755
  %757 = vmatprep.mubr.f32.mxu0 %v562
  %758 = vmatmul.mubr.f32.gmra.mrb[0].mxu0 %v470
  %v759 = vpop.f32.mrb[0].mxu0
  %v760 = vadd.f32 %v516, %v759
  %v761 = vpop.f32.mrb[0].mxu0
  %v762 = vadd.f32 %v520, %v761
  %763 = vmatprep.mubr.f32.mxu0 %v564
  %764 = vmatmul.mubr.f32.gmra.mrb[0].mxu0 %v471
  %v765 = vpop.f32.mrb[0].mxu0
  %v766 = vadd.f32 %v516, %v765
  %v767 = vpop.f32.mrb[0].mxu0
  %v768 = vadd.f32 %v520, %v767
  %769 = vmatprep.mubr.f32.mxu0 %v566
  %770 = vmatmul.mubr.f32.gmra.mrb[0].mxu0 %v472
  %v771 = vpop.f32.mrb[0].mxu0
  %v772 = vadd.f32 %v516, %v771
  %v773 = vpop.f32.mrb[0].mxu0
  %v774 = vadd.f32 %v520, %v773
  %775 = vmatprep.mubr.f32.mxu0 %v568
  %776 = vmatmul.mubr.f32.gmra.mrb[0].mxu0 %v473
  %v777 = vpop.f32.mrb[0].mxu0
  %v778 = vadd.f32 %v516, %v777
  %v779 = vpop.f32.mrb[0].mxu0
  %v780 = vadd.f32 %v520, %v779
  %781 = vmatprep.mubr.f32.mxu0 %v570
  %782 = vmatmul.mubr.f32.gmra.mrb[0].mxu0 %v474
  %v783 = vpop.f32.mrb[0].mxu0
  %v784 = vadd.f32 %v516, %v783
  %v785 = vpop.f32.mrb[0].mxu0
  %v786 = vadd.f32 %v520, %v785
  %787 = vdwg.mxu0
  %v788 = vmax.f32 %v646, %v652
  %v789 = vmax.f32 %v648, %v654
  %v790 = vmax.f32 %v658, %v664
  %v791 = vmax.f32 %v660, %v666
  %v792 = vmax.f32 %v670, %v676
  %v793 = vmax.f32 %v672, %v678
  %v794 = vmax.f32 %v682, %v688
  %v795 = vmax.f32 %v684, %v690
  %v796 = vmax.f32 %v694, %v700
  %v797 = vmax.f32 %v696, %v702
  %v798 = vmax.f32 %v706, %v712
  %v799 = vmax.f32 %v708, %v714
  %v800 = vmax.f32 %v718, %v724
  %v801 = vmax.f32 %v720, %v726
  %v802 = vmax.f32 %v730, %v736
  %v803 = vmax.f32 %v732, %v738
  %v804 = vmax.f32 %v742, %v748
  %v805 = vmax.f32 %v744, %v750
  %v806 = vmax.f32 %v754, %v760
  %v807 = vmax.f32 %v756, %v762
  %v808 = vmax.f32 %v766, %v772
  %v809 = vmax.f32 %v768, %v774
  %v810 = vmax.f32 %v778, %v784
  %v811 = vmax.f32 %v780, %v786
  %v812 = vmax.f32 %v788, %v789
  %v813 = vmax.f32 %v790, %v791
  %v814 = vmax.f32 %v792, %v793
  %v815 = vmax.f32 %v794, %v795
  %v816 = vmax.f32 %v796, %v797
  %v817 = vmax.f32 %v798, %v799
  %v818 = vmax.f32 %v800, %v801
  %v819 = vmax.f32 %v802, %v803
  %v820 = vmax.f32 %v804, %v805
  %v821 = vmax.f32 %v806, %v807
  %v822 = vmax.f32 %v808, %v809
  %v823 = vmax.f32 %v810, %v811
  %v824 = vmax.f32 %v812, 0.0
  %v825 = vmax.f32 %v813, 0.0
  %v826 = vmax.f32 %v814, 0.0
  %v827 = vmax.f32 %v815, 0.0
  %v828 = vmax.f32 %v816, 0.0
  %v829 = vmax.f32 %v817, 0.0
  %v830 = vmax.f32 %v818, 0.0
  %v831 = vmax.f32 %v819, 0.0
  %v832 = vmax.f32 %v820, 0.0
  %v833 = vmax.f32 %v821, 0.0
  %v834 = vmax.f32 %v822, 0.0
  %v835 = vmax.f32 %v823, 0.0
  %v836 = vld [vmem:[%s3] sm:$0xff]
  %v837 = vld [vmem:[%s3 + $0x8] sm:$0xff]
  %v838 = vld [vmem:[%s3 + $0x10] sm:$0xff]
  %v839 = vld [vmem:[%s3 + $0x18] sm:$0xff]
  %v840 = vld [vmem:[%s3 + $0x20] sm:$0xff]
  %v841 = vld [vmem:[%s3 + $0x28] sm:$0xff]
  %v842 = vld [vmem:[%s3 + $0x30] sm:$0xff]
  %v843 = vld [vmem:[%s3 + $0x38] sm:$0xff]
  %v844 = vld [vmem:[%s3 + $0x40] sm:$0xff]
  %v845 = vld [vmem:[%s3 + $0x48] sm:$0xff]
  %v846 = vld [vmem:[%s3 + $0x50] sm:$0xff]
  %v847 = vld [vmem:[%s3 + $0x58] sm:$0xff]
  %v848 = vld [vmem:[%s3 + $0x60] sm:$0xff]
  %v849 = vld [vmem:[%s3 + $0x68] sm:$0xff]
  %v850 = vld [vmem:[%s3 + $0x70] sm:$0xff]
  %v851 = vld [vmem:[%s3 + $0x78] sm:$0xff]
  %v852 = vld [vmem:[%s3 + $0x80] sm:$0xff]
  %v853 = vld [vmem:[%s3 + $0x88] sm:$0xff]
  %v854 = vld [vmem:[%s3 + $0x90] sm:$0xff]
  %v855 = vld [vmem:[%s3 + $0x98] sm:$0xff]
  %v856 = vld [vmem:[%s3 + $0xa0] sm:$0xff]
  %v857 = vld [vmem:[%s3 + $0xa8] sm:$0xff]
  %v858 = vld [vmem:[%s3 + $0xb0] sm:$0xff]
  %v859 = vld [vmem:[%s3 + $0xb8] sm:$0xff]
  %v860 = vld [vmem:[%s3 + $0xc0] sm:$0xff]
  %v861 = vld [vmem:[%s3 + $0xc8] sm:$0xff]
  %v862 = vld [vmem:[%s3 + $0xd0] sm:$0xff]
  %v863 = vld [vmem:[%s3 + $0xd8] sm:$0xff]
  %v864 = vld [vmem:[%s3 + $0xe0] sm:$0xff]
  %v865 = vld [vmem:[%s3 + $0xe8] sm:$0xff]
  %v866 = vld [vmem:[%s3 + $0xf0] sm:$0xff]
  %v867 = vld [vmem:[%s3 + $0xf8] sm:$0xff]
  %s868 = scalar_lea.vmem %s3, 256
  %v869 = vld [vmem:[%s868] sm:$0xff]
  %v870 = vld [vmem:[%s868 + $0x8] sm:$0xff]
  %v871 = vld [vmem:[%s868 + $0x10] sm:$0xff]
  %v872 = vld [vmem:[%s868 + $0x18] sm:$0xff]
  %v873 = vld [vmem:[%s868 + $0x20] sm:$0xff]
  %v874 = vld [vmem:[%s868 + $0x28] sm:$0xff]
  %v875 = vld [vmem:[%s868 + $0x30] sm:$0xff]
  %v876 = vld [vmem:[%s868 + $0x38] sm:$0xff]
  %v877 = vld [vmem:[%s868 + $0x40] sm:$0xff]
  %v878 = vld [vmem:[%s868 + $0x48] sm:$0xff]
  %v879 = vld [vmem:[%s868 + $0x50] sm:$0xff]
  %v880 = vld [vmem:[%s868 + $0x58] sm:$0xff]
  %v881 = vld [vmem:[%s868 + $0x60] sm:$0xff]
  %v882 = vld [vmem:[%s868 + $0x68] sm:$0xff]
  %v883 = vld [vmem:[%s868 + $0x70] sm:$0xff]
  %v884 = vld [vmem:[%s868 + $0x78] sm:$0xff]
  %v885 = vld [vmem:[%s868 + $0x80] sm:$0xff]
  %v886 = vld [vmem:[%s868 + $0x88] sm:$0xff]
  %v887 = vld [vmem:[%s868 + $0x90] sm:$0xff]
  %v888 = vld [vmem:[%s868 + $0x98] sm:$0xff]
  %v889 = vld [vmem:[%s868 + $0xa0] sm:$0xff]
  %v890 = vld [vmem:[%s868 + $0xa8] sm:$0xff]
  %v891 = vld [vmem:[%s868 + $0xb0] sm:$0xff]
  %v892 = vld [vmem:[%s868 + $0xb8] sm:$0xff]
  %v893 = vld [vmem:[%s868 + $0xc0] sm:$0xff]
  %v894 = vld [vmem:[%s868 + $0xc8] sm:$0xff]
  %v895 = vld [vmem:[%s868 + $0xd0] sm:$0xff]
  %v896 = vld [vmem:[%s868 + $0xd8] sm:$0xff]
  %v897 = vld [vmem:[%s868 + $0xe0] sm:$0xff]
  %v898 = vld [vmem:[%s868 + $0xe8] sm:$0xff]
  %v899 = vld [vmem:[%s868 + $0xf0] sm:$0xff]
  %v900 = vld [vmem:[%s868 + $0xf8] sm:$0xff]
  %901 = vmatprep.subr.mxu0 %v870
  %902 = vmatpush1.msra.mxu0 %v869
  %903 = vmatprep.subr.mxu0 %v872
  %904 = vmatpush1.msra.mxu0 %v871
  %905 = vmatprep.subr.mxu0 %v874
  %906 = vmatpush1.msra.mxu0 %v873
  %907 = vmatprep.subr.mxu0 %v876
  %908 = vmatpush1.msra.mxu0 %v875
  %909 = vmatprep.subr.mxu0 %v878
  %910 = vmatpush1.msra.mxu0 %v877
  %911 = vmatprep.subr.mxu0 %v880
  %912 = vmatpush1.msra.mxu0 %v879
  %913 = vmatprep.subr.mxu0 %v882
  %914 = vmatpush1.msra.mxu0 %v881
  %915 = vmatprep.subr.mxu0 %v884
  %916 = vmatpush1.msra.mxu0 %v883
  %917 = vmatprep.subr.mxu0 %v886
  %918 = vmatpush1.msra.mxu0 %v885
  %919 = vmatprep.subr.mxu0 %v888
  %920 = vmatpush1.msra.mxu0 %v887
  %921 = vmatprep.subr.mxu0 %v890
  %922 = vmatpush1.msra.mxu0 %v889
  %923 = vmatprep.subr.mxu0 %v892
  %924 = vmatpush1.msra.mxu0 %v891
  %925 = vmatprep.subr.mxu0 %v894
  %926 = vmatpush1.msra.mxu0 %v893
  %927 = vmatprep.subr.mxu0 %v896
  %928 = vmatpush1.msra.mxu0 %v895
  %929 = vmatprep.subr.mxu0 %v898
  %930 = vmatpush1.msra.mxu0 %v897
  %931 = vmatprep.subr.mxu0 %v900
  %932 = vmatpush1.msra.mxu0 %v899
  %933 = vmatprep.subr.mxu0 0.0
  %934 = vmatpush1.msra.mxu0 0.0
  %935 = vmatprep.subr.mxu0 0.0
  %936 = vmatpush1.msra.mxu0 0.0
  %937 = vmatprep.subr.mxu0 0.0
  %938 = vmatpush1.msra.mxu0 0.0
  %939 = vmatprep.subr.mxu0 0.0
  %940 = vmatpush1.msra.mxu0 0.0
  %941 = vmatprep.subr.mxu0 0.0
  %942 = vmatpush1.msra.mxu0 0.0
  %943 = vmatprep.subr.mxu0 0.0
  %944 = vmatpush1.msra.mxu0 0.0
  %945 = vmatprep.subr.mxu0 0.0
  %946 = vmatpush1.msra.mxu0 0.0
  %947 = vmatprep.subr.mxu0 0.0
  %948 = vmatpush1.msra.mxu0 0.0
  %949 = vmatprep.subr.mxu0 0.0
  %950 = vmatpush1.msra.mxu0 0.0
  %951 = vmatprep.subr.mxu0 0.0
  %952 = vmatpush1.msra.mxu0 0.0
  %953 = vmatprep.subr.mxu0 0.0
  %954 = vmatpush1.msra.mxu0 0.0
  %955 = vmatprep.subr.mxu0 0.0
  %956 = vmatpush1.msra.mxu0 0.0
  %957 = vmatprep.subr.mxu0 0.0
  %958 = vmatpush1.msra.mxu0 0.0
  %959 = vmatprep.subr.mxu0 0.0
  %960 = vmatpush1.msra.mxu0 0.0
  %961 = vmatprep.subr.mxu0 0.0
  %962 = vmatpush1.msra.mxu0 0.0
  %963 = vmatprep.subr.mxu0 0.0
  %964 = vmatpush1.msra.mxu0 0.0
  %965 = vmatprep.mubr.f32.mxu0 0.0
  %966 = vmatmul.mubr.f32.gmra.mrb[0].mxu0 %v825
  %v967 = vpop.f32.mrb[0].mxu0
  %v968 = vadd.f32 0.0, %v967
  %v969 = vpop.f32.mrb[0].mxu0
  %v970 = vadd.f32 0.0, %v969
  %971 = vmatprep.mubr.f32.mxu0 0.0
  %972 = vmatmul.mubr.f32.gmra.mrb[0].mxu0 %v826
  %v973 = vpop.f32.mrb[0].mxu0
  %v974 = vadd.f32 0.0, %v973
  %v975 = vpop.f32.mrb[0].mxu0
  %v976 = vadd.f32 0.0, %v975
  %977 = vmatprep.mubr.f32.mxu0 0.0
  %978 = vmatmul.mubr.f32.gmra.mrb[0].mxu0 %v827
  %v979 = vpop.f32.mrb[0].mxu0
  %v980 = vadd.f32 0.0, %v979
  %v981 = vpop.f32.mrb[0].mxu0
  %v982 = vadd.f32 0.0, %v981
  %983 = vmatprep.mubr.f32.mxu0 0.0
  %984 = vmatmul.mubr.f32.gmra.mrb[0].mxu0 %v828
  %v985 = vpop.f32.mrb[0].mxu0
  %v986 = vadd.f32 0.0, %v985
  %v987 = vpop.f32.mrb[0].mxu0
  %v988 = vadd.f32 0.0, %v987
  %989 = vmatprep.mubr.f32.mxu0 0.0
  %990 = vmatmul.mubr.f32.gmra.mrb[0].mxu0 %v829
  %v991 = vpop.f32.mrb[0].mxu0
  %v992 = vadd.f32 0.0, %v991
  %v993 = vpop.f32.mrb[0].mxu0
  %v994 = vadd.f32 0.0, %v993
  %995 = vmatprep.mubr.f32.mxu0 0.0
  %996 = vmatmul.mubr.f32.gmra.mrb[0].mxu0 %v830
  %v997 = vpop.f32.mrb[0].mxu0
  %v998 = vadd.f32 0.0, %v997
  %v999 = vpop.f32.mrb[0].mxu0
  %v1000 = vadd.f32 0.0, %v999
  %1001 = vmatprep.mubr.f32.mxu0 0.0
  %1002 = vmatmul.mubr.f32.gmra.mrb[0].mxu0 %v831
  %v1003 = vpop.f32.mrb[0].mxu0
  %v1004 = vadd.f32 0.0, %v1003
  %v1005 = vpop.f32.mrb[0].mxu0
  %v1006 = vadd.f32 0.0, %v1005
  %1007 = vmatprep.mubr.f32.mxu0 0.0
  %1008 = vmatmul.mubr.f32.gmra.mrb[0].mxu0 %v832
  %v1009 = vpop.f32.mrb[0].mxu0
  %v1010 = vadd.f32 0.0, %v1009
  %v1011 = vpop.f32.mrb[0].mxu0
  %v1012 = vadd.f32 0.0, %v1011
  %1013 = vdwg.mxu0
  %1014 = vmatprep.subr.mxu0 %v837
  %1015 = vmatpush1.msra.mxu0 %v836
  %1016 = vmatprep.subr.mxu0 %v839
  %1017 = vmatpush1.msra.mxu0 %v838
  %1018 = vmatprep.subr.mxu0 %v841
  %1019 = vmatpush1.msra.mxu0 %v840
  %1020 = vmatprep.subr.mxu0 %v843
  %1021 = vmatpush1.msra.mxu0 %v842
  %1022 = vmatprep.subr.mxu0 %v845
  %1023 = vmatpush1.msra.mxu0 %v844
  %1024 = vmatprep.subr.mxu0 %v847
  %1025 = vmatpush1.msra.mxu0 %v846
  %1026 = vmatprep.subr.mxu0 %v849
  %1027 = vmatpush1.msra.mxu0 %v848
  %1028 = vmatprep.subr.mxu0 %v851
  %1029 = vmatpush1.msra.mxu0 %v850
  %1030 = vmatprep.subr.mxu0 %v853
  %1031 = vmatpush1.msra.mxu0 %v852
  %1032 = vmatprep.subr.mxu0 %v855
  %1033 = vmatpush1.msra.mxu0 %v854
  %1034 = vmatprep.subr.mxu0 %v857
  %1035 = vmatpush1.msra.mxu0 %v856
  %1036 = vmatprep.subr.mxu0 %v859
  %1037 = vmatpush1.msra.mxu0 %v858
  %1038 = vmatprep.subr.mxu0 %v861
  %1039 = vmatpush1.msra.mxu0 %v860
  %1040 = vmatprep.subr.mxu0 %v863
  %1041 = vmatpush1.msra.mxu0 %v862
  %1042 = vmatprep.subr.mxu0 %v865
  %1043 = vmatpush1.msra.mxu0 %v864
  %1044 = vmatprep.subr.mxu0 %v867
  %1045 = vmatpush1.msra.mxu0 %v866
  %1046 = vmatprep.subr.mxu0 0.0
  %1047 = vmatpush1.msra.mxu0 0.0
  %1048 = vmatprep.subr.mxu0 0.0
  %1049 = vmatpush1.msra.mxu0 0.0
  %1050 = vmatprep.subr.mxu0 0.0
  %1051 = vmatpush1.msra.mxu0 0.0
  %1052 = vmatprep.subr.mxu0 0.0
  %1053 = vmatpush1.msra.mxu0 0.0
  %1054 = vmatprep.subr.mxu0 0.0
  %1055 = vmatpush1.msra.mxu0 0.0
  %1056 = vmatprep.subr.mxu0 0.0
  %1057 = vmatpush1.msra.mxu0 0.0
  %1058 = vmatprep.subr.mxu0 0.0
  %1059 = vmatpush1.msra.mxu0 0.0
  %1060 = vmatprep.subr.mxu0 0.0
  %1061 = vmatpush1.msra.mxu0 0.0
  %1062 = vmatprep.subr.mxu0 0.0
  %1063 = vmatpush1.msra.mxu0 0.0
  %1064 = vmatprep.subr.mxu0 0.0
  %1065 = vmatpush1.msra.mxu0 0.0
  %1066 = vmatprep.subr.mxu0 0.0
  %1067 = vmatpush1.msra.mxu0 0.0
  %1068 = vmatprep.subr.mxu0 0.0
  %1069 = vmatpush1.msra.mxu0 0.0
  %1070 = vmatprep.subr.mxu0 0.0
  %1071 = vmatpush1.msra.mxu0 0.0
  %1072 = vmatprep.subr.mxu0 0.0
  %1073 = vmatpush1.msra.mxu0 0.0
  %1074 = vmatprep.subr.mxu0 0.0
  %1075 = vmatpush1.msra.mxu0 0.0
  %1076 = vmatprep.subr.mxu0 0.0
  %1077 = vmatpush1.msra.mxu0 0.0
  %1078 = vmatprep.mubr.f32.mxu0 0.0
  %1079 = vmatmul.mubr.f32.gmra.mrb[0].mxu0 %v824
  %v1080 = vpop.f32.mrb[0].mxu0
  %v1081 = vadd.f32 %v968, %v1080
  %v1082 = vpop.f32.mrb[0].mxu0
  %v1083 = vadd.f32 %v970, %v1082
  %1084 = vmatprep.mubr.f32.mxu0 0.0
  %1085 = vmatmul.mubr.f32.gmra.mrb[0].mxu0 %v825
  %v1086 = vpop.f32.mrb[0].mxu0
  %v1087 = vadd.f32 %v974, %v1086
  %v1088 = vpop.f32.mrb[0].mxu0
  %v1089 = vadd.f32 %v976, %v1088
  %1090 = vmatprep.mubr.f32.mxu0 0.0
  %1091 = vmatmul.mubr.f32.gmra.mrb[0].mxu0 %v826
  %v1092 = vpop.f32.mrb[0].mxu0
  %v1093 = vadd.f32 %v980, %v1092
  %v1094 = vpop.f32.mrb[0].mxu0
  %v1095 = vadd.f32 %v982, %v1094
  %1096 = vmatprep.mubr.f32.mxu0 0.0
  %1097 = vmatmul.mubr.f32.gmra.mrb[0].mxu0 %v827
  %v1098 = vpop.f32.mrb[0].mxu0
  %v1099 = vadd.f32 %v986, %v1098
  %v1100 = vpop.f32.mrb[0].mxu0
  %v1101 = vadd.f32 %v988, %v1100
  %1102 = vmatprep.mubr.f32.mxu0 0.0
  %1103 = vmatmul.mubr.f32.gmra.mrb[0].mxu0 %v828
  %v1104 = vpop.f32.mrb[0].mxu0
  %v1105 = vadd.f32 %v992, %v1104
  %v1106 = vpop.f32.mrb[0].mxu0
  %v1107 = vadd.f32 %v994, %v1106
  %1108 = vmatprep.mubr.f32.mxu0 0.0
  %1109 = vmatmul.mubr.f32.gmra.mrb[0].mxu0 %v829
  %v1110 = vpop.f32.mrb[0].mxu0
  %v1111 = vadd.f32 %v998, %v1110
  %v1112 = vpop.f32.mrb[0].mxu0
  %v1113 = vadd.f32 %v1000, %v1112
  %1114 = vmatprep.mubr.f32.mxu0 0.0
  %1115 = vmatmul.mubr.f32.gmra.mrb[0].mxu0 %v830
  %v1116 = vpop.f32.mrb[0].mxu0
  %v1117 = vadd.f32 %v1004, %v1116
  %v1118 = vpop.f32.mrb[0].mxu0
  %v1119 = vadd.f32 %v1006, %v1118
  %1120 = vmatprep.mubr.f32.mxu0 0.0
  %1121 = vmatmul.mubr.f32.gmra.mrb[0].mxu0 %v831
  %v1122 = vpop.f32.mrb[0].mxu0
  %v1123 = vadd.f32 %v1010, %v1122
  %v1124 = vpop.f32.mrb[0].mxu0
  %v1125 = vadd.f32 %v1012, %v1124
  %1126 = vdwg.mxu0
  %s1127 = scalar_lea.vmem %s3, 512
  %v1128 = vld [vmem:[%s1127] sm:$0xff]
  %v1129 = vld [vmem:[%s1127 + $0x8] sm:$0xff]
  %v1130 = vld [vmem:[%s1127 + $0x10] sm:$0xff]
  %v1131 = vld [vmem:[%s1127 + $0x18] sm:$0xff]
  %v1132 = vld [vmem:[%s1127 + $0x20] sm:$0xff]
  %v1133 = vld [vmem:[%s1127 + $0x28] sm:$0xff]
  %v1134 = vld [vmem:[%s1127 + $0x30] sm:$0xff]
  %v1135 = vld [vmem:[%s1127 + $0x38] sm:$0xff]
  %v1136 = vld [vmem:[%s1127 + $0x40] sm:$0xff]
  %v1137 = vld [vmem:[%s1127 + $0x48] sm:$0xff]
  %v1138 = vld [vmem:[%s1127 + $0x50] sm:$0xff]
  %v1139 = vld [vmem:[%s1127 + $0x58] sm:$0xff]
  %v1140 = vld [vmem:[%s1127 + $0x60] sm:$0xff]
  %v1141 = vld [vmem:[%s1127 + $0x68] sm:$0xff]
  %v1142 = vld [vmem:[%s1127 + $0x70] sm:$0xff]
  %v1143 = vld [vmem:[%s1127 + $0x78] sm:$0xff]
  %v1144 = vld [vmem:[%s1127 + $0x80] sm:$0xff]
  %v1145 = vld [vmem:[%s1127 + $0x88] sm:$0xff]
  %v1146 = vld [vmem:[%s1127 + $0x90] sm:$0xff]
  %v1147 = vld [vmem:[%s1127 + $0x98] sm:$0xff]
  %v1148 = vld [vmem:[%s1127 + $0xa0] sm:$0xff]
  %v1149 = vld [vmem:[%s1127 + $0xa8] sm:$0xff]
  %v1150 = vld [vmem:[%s1127 + $0xb0] sm:$0xff]
  %v1151 = vld [vmem:[%s1127 + $0xb8] sm:$0xff]
  %v1152 = vld [vmem:[%s1127 + $0xc0] sm:$0xff]
  %v1153 = vld [vmem:[%s1127 + $0xc8] sm:$0xff]
  %v1154 = vld [vmem:[%s1127 + $0xd0] sm:$0xff]
  %v1155 = vld [vmem:[%s1127 + $0xd8] sm:$0xff]
  %v1156 = vld [vmem:[%s1127 + $0xe0] sm:$0xff]
  %v1157 = vld [vmem:[%s1127 + $0xe8] sm:$0xff]
  %v1158 = vld [vmem:[%s1127 + $0xf0] sm:$0xff]
  %v1159 = vld [vmem:[%s1127 + $0xf8] sm:$0xff]
  %1160 = vmatprep.subr.mxu0 %v1129
  %1161 = vmatpush1.msra.mxu0 %v1128
  %1162 = vmatprep.subr.mxu0 %v1131
  %1163 = vmatpush1.msra.mxu0 %v1130
  %1164 = vmatprep.subr.mxu0 %v1133
  %1165 = vmatpush1.msra.mxu0 %v1132
  %1166 = vmatprep.subr.mxu0 %v1135
  %1167 = vmatpush1.msra.mxu0 %v1134
  %1168 = vmatprep.subr.mxu0 %v1137
  %1169 = vmatpush1.msra.mxu0 %v1136
  %1170 = vmatprep.subr.mxu0 %v1139
  %1171 = vmatpush1.msra.mxu0 %v1138
  %1172 = vmatprep.subr.mxu0 %v1141
  %1173 = vmatpush1.msra.mxu0 %v1140
  %1174 = vmatprep.subr.mxu0 %v1143
  %1175 = vmatpush1.msra.mxu0 %v1142
  %1176 = vmatprep.subr.mxu0 %v1145
  %1177 = vmatpush1.msra.mxu0 %v1144
  %1178 = vmatprep.subr.mxu0 %v1147
  %1179 = vmatpush1.msra.mxu0 %v1146
  %1180 = vmatprep.subr.mxu0 %v1149
  %1181 = vmatpush1.msra.mxu0 %v1148
  %1182 = vmatprep.subr.mxu0 %v1151
  %1183 = vmatpush1.msra.mxu0 %v1150
  %1184 = vmatprep.subr.mxu0 %v1153
  %1185 = vmatpush1.msra.mxu0 %v1152
  %1186 = vmatprep.subr.mxu0 %v1155
  %1187 = vmatpush1.msra.mxu0 %v1154
  %1188 = vmatprep.subr.mxu0 %v1157
  %1189 = vmatpush1.msra.mxu0 %v1156
  %1190 = vmatprep.subr.mxu0 %v1159
  %1191 = vmatpush1.msra.mxu0 %v1158
  %1192 = vmatprep.subr.mxu0 0.0
  %1193 = vmatpush1.msra.mxu0 0.0
  %1194 = vmatprep.subr.mxu0 0.0
  %1195 = vmatpush1.msra.mxu0 0.0
  %1196 = vmatprep.subr.mxu0 0.0
  %1197 = vmatpush1.msra.mxu0 0.0
  %1198 = vmatprep.subr.mxu0 0.0
  %1199 = vmatpush1.msra.mxu0 0.0
  %1200 = vmatprep.subr.mxu0 0.0
  %1201 = vmatpush1.msra.mxu0 0.0
  %1202 = vmatprep.subr.mxu0 0.0
  %1203 = vmatpush1.msra.mxu0 0.0
  %1204 = vmatprep.subr.mxu0 0.0
  %1205 = vmatpush1.msra.mxu0 0.0
  %1206 = vmatprep.subr.mxu0 0.0
  %1207 = vmatpush1.msra.mxu0 0.0
  %1208 = vmatprep.subr.mxu0 0.0
  %1209 = vmatpush1.msra.mxu0 0.0
  %1210 = vmatprep.subr.mxu0 0.0
  %1211 = vmatpush1.msra.mxu0 0.0
  %1212 = vmatprep.subr.mxu0 0.0
  %1213 = vmatpush1.msra.mxu0 0.0
  %1214 = vmatprep.subr.mxu0 0.0
  %1215 = vmatpush1.msra.mxu0 0.0
  %1216 = vmatprep.subr.mxu0 0.0
  %1217 = vmatpush1.msra.mxu0 0.0
  %1218 = vmatprep.subr.mxu0 0.0
  %1219 = vmatpush1.msra.mxu0 0.0
  %1220 = vmatprep.subr.mxu0 0.0
  %1221 = vmatpush1.msra.mxu0 0.0
  %1222 = vmatprep.subr.mxu0 0.0
  %1223 = vmatpush1.msra.mxu0 0.0
  %1224 = vmatprep.mubr.f32.mxu0 0.0
  %1225 = vmatmul.mubr.f32.gmra.mrb[0].mxu0 %v826
  %v1226 = vpop.f32.mrb[0].mxu0
  %v1227 = vadd.f32 0.0, %v1226
  %v1228 = vpop.f32.mrb[0].mxu0
  %v1229 = vadd.f32 0.0, %v1228
  %1230 = vmatprep.mubr.f32.mxu0 0.0
  %1231 = vmatmul.mubr.f32.gmra.mrb[0].mxu0 %v827
  %v1232 = vpop.f32.mrb[0].mxu0
  %v1233 = vadd.f32 0.0, %v1232
  %v1234 = vpop.f32.mrb[0].mxu0
  %v1235 = vadd.f32 0.0, %v1234
  %1236 = vmatprep.mubr.f32.mxu0 0.0
  %1237 = vmatmul.mubr.f32.gmra.mrb[0].mxu0 %v828
  %v1238 = vpop.f32.mrb[0].mxu0
  %v1239 = vadd.f32 0.0, %v1238
  %v1240 = vpop.f32.mrb[0].mxu0
  %v1241 = vadd.f32 0.0, %v1240
  %1242 = vmatprep.mubr.f32.mxu0 0.0
  %1243 = vmatmul.mubr.f32.gmra.mrb[0].mxu0 %v829
  %v1244 = vpop.f32.mrb[0].mxu0
  %v1245 = vadd.f32 0.0, %v1244
  %v1246 = vpop.f32.mrb[0].mxu0
  %v1247 = vadd.f32 0.0, %v1246
  %1248 = vmatprep.mubr.f32.mxu0 0.0
  %1249 = vmatmul.mubr.f32.gmra.mrb[0].mxu0 %v830
  %v1250 = vpop.f32.mrb[0].mxu0
  %v1251 = vadd.f32 0.0, %v1250
  %v1252 = vpop.f32.mrb[0].mxu0
  %v1253 = vadd.f32 0.0, %v1252
  %1254 = vmatprep.mubr.f32.mxu0 0.0
  %1255 = vmatmul.mubr.f32.gmra.mrb[0].mxu0 %v831
  %v1256 = vpop.f32.mrb[0].mxu0
  %v1257 = vadd.f32 0.0, %v1256
  %v1258 = vpop.f32.mrb[0].mxu0
  %v1259 = vadd.f32 0.0, %v1258
  %1260 = vmatprep.mubr.f32.mxu0 0.0
  %1261 = vmatmul.mubr.f32.gmra.mrb[0].mxu0 %v832
  %v1262 = vpop.f32.mrb[0].mxu0
  %v1263 = vadd.f32 0.0, %v1262
  %v1264 = vpop.f32.mrb[0].mxu0
  %v1265 = vadd.f32 0.0, %v1264
  %1266 = vmatprep.mubr.f32.mxu0 0.0
  %1267 = vmatmul.mubr.f32.gmra.mrb[0].mxu0 %v833
  %v1268 = vpop.f32.mrb[0].mxu0
  %v1269 = vadd.f32 0.0, %v1268
  %v1270 = vpop.f32.mrb[0].mxu0
  %v1271 = vadd.f32 0.0, %v1270
  %1272 = vdwg.mxu0
  %v1273 = vadd.f32 %v1081, %v1227
  %v1274 = vadd.f32 %v1083, %v1229
  %v1275 = vadd.f32 %v1087, %v1233
  %v1276 = vadd.f32 %v1089, %v1235
  %v1277 = vadd.f32 %v1093, %v1239
  %v1278 = vadd.f32 %v1095, %v1241
  %v1279 = vadd.f32 %v1099, %v1245
  %v1280 = vadd.f32 %v1101, %v1247
  %v1281 = vadd.f32 %v1105, %v1251
  %v1282 = vadd.f32 %v1107, %v1253
  %v1283 = vadd.f32 %v1111, %v1257
  %v1284 = vadd.f32 %v1113, %v1259
  %v1285 = vadd.f32 %v1117, %v1263
  %v1286 = vadd.f32 %v1119, %v1265
  %v1287 = vadd.f32 %v1123, %v1269
  %v1288 = vadd.f32 %v1125, %v1271
  %s1289 = scalar_lea.vmem %s3, 768
  %v1290 = vld [vmem:[%s1289] sm:$0xff]
  %v1291 = vld [vmem:[%s1289 + $0x8] sm:$0xff]
  %v1292 = vld [vmem:[%s1289 + $0x10] sm:$0xff]
  %v1293 = vld [vmem:[%s1289 + $0x18] sm:$0xff]
  %v1294 = vld [vmem:[%s1289 + $0x20] sm:$0xff]
  %v1295 = vld [vmem:[%s1289 + $0x28] sm:$0xff]
  %v1296 = vld [vmem:[%s1289 + $0x30] sm:$0xff]
  %v1297 = vld [vmem:[%s1289 + $0x38] sm:$0xff]
  %v1298 = vld [vmem:[%s1289 + $0x40] sm:$0xff]
  %v1299 = vld [vmem:[%s1289 + $0x48] sm:$0xff]
  %v1300 = vld [vmem:[%s1289 + $0x50] sm:$0xff]
  %v1301 = vld [vmem:[%s1289 + $0x58] sm:$0xff]
  %v1302 = vld [vmem:[%s1289 + $0x60] sm:$0xff]
  %v1303 = vld [vmem:[%s1289 + $0x68] sm:$0xff]
  %v1304 = vld [vmem:[%s1289 + $0x70] sm:$0xff]
  %v1305 = vld [vmem:[%s1289 + $0x78] sm:$0xff]
  %v1306 = vld [vmem:[%s1289 + $0x80] sm:$0xff]
  %v1307 = vld [vmem:[%s1289 + $0x88] sm:$0xff]
  %v1308 = vld [vmem:[%s1289 + $0x90] sm:$0xff]
  %v1309 = vld [vmem:[%s1289 + $0x98] sm:$0xff]
  %v1310 = vld [vmem:[%s1289 + $0xa0] sm:$0xff]
  %v1311 = vld [vmem:[%s1289 + $0xa8] sm:$0xff]
  %v1312 = vld [vmem:[%s1289 + $0xb0] sm:$0xff]
  %v1313 = vld [vmem:[%s1289 + $0xb8] sm:$0xff]
  %v1314 = vld [vmem:[%s1289 + $0xc0] sm:$0xff]
  %v1315 = vld [vmem:[%s1289 + $0xc8] sm:$0xff]
  %v1316 = vld [vmem:[%s1289 + $0xd0] sm:$0xff]
  %v1317 = vld [vmem:[%s1289 + $0xd8] sm:$0xff]
  %v1318 = vld [vmem:[%s1289 + $0xe0] sm:$0xff]
  %v1319 = vld [vmem:[%s1289 + $0xe8] sm:$0xff]
  %v1320 = vld [vmem:[%s1289 + $0xf0] sm:$0xff]
  %v1321 = vld [vmem:[%s1289 + $0xf8] sm:$0xff]
  %1322 = vmatprep.subr.mxu0 %v1291
  %1323 = vmatpush1.msra.mxu0 %v1290
  %1324 = vmatprep.subr.mxu0 %v1293
  %1325 = vmatpush1.msra.mxu0 %v1292
  %1326 = vmatprep.subr.mxu0 %v1295
  %1327 = vmatpush1.msra.mxu0 %v1294
  %1328 = vmatprep.subr.mxu0 %v1297
  %1329 = vmatpush1.msra.mxu0 %v1296
  %1330 = vmatprep.subr.mxu0 %v1299
  %1331 = vmatpush1.msra.mxu0 %v1298
  %1332 = vmatprep.subr.mxu0 %v1301
  %1333 = vmatpush1.msra.mxu0 %v1300
  %1334 = vmatprep.subr.mxu0 %v1303
  %1335 = vmatpush1.msra.mxu0 %v1302
  %1336 = vmatprep.subr.mxu0 %v1305
  %1337 = vmatpush1.msra.mxu0 %v1304
  %1338 = vmatprep.subr.mxu0 %v1307
  %1339 = vmatpush1.msra.mxu0 %v1306
  %1340 = vmatprep.subr.mxu0 %v1309
  %1341 = vmatpush1.msra.mxu0 %v1308
  %1342 = vmatprep.subr.mxu0 %v1311
  %1343 = vmatpush1.msra.mxu0 %v1310
  %1344 = vmatprep.subr.mxu0 %v1313
  %1345 = vmatpush1.msra.mxu0 %v1312
  %1346 = vmatprep.subr.mxu0 %v1315
  %1347 = vmatpush1.msra.mxu0 %v1314
  %1348 = vmatprep.subr.mxu0 %v1317
  %1349 = vmatpush1.msra.mxu0 %v1316
  %1350 = vmatprep.subr.mxu0 %v1319
  %1351 = vmatpush1.msra.mxu0 %v1318
  %1352 = vmatprep.subr.mxu0 %v1321
  %1353 = vmatpush1.msra.mxu0 %v1320
  %1354 = vmatprep.subr.mxu0 0.0
  %1355 = vmatpush1.msra.mxu0 0.0
  %1356 = vmatprep.subr.mxu0 0.0
  %1357 = vmatpush1.msra.mxu0 0.0
  %1358 = vmatprep.subr.mxu0 0.0
  %1359 = vmatpush1.msra.mxu0 0.0
  %1360 = vmatprep.subr.mxu0 0.0
  %1361 = vmatpush1.msra.mxu0 0.0
  %1362 = vmatprep.subr.mxu0 0.0
  %1363 = vmatpush1.msra.mxu0 0.0
  %1364 = vmatprep.subr.mxu0 0.0
  %1365 = vmatpush1.msra.mxu0 0.0
  %1366 = vmatprep.subr.mxu0 0.0
  %1367 = vmatpush1.msra.mxu0 0.0
  %1368 = vmatprep.subr.mxu0 0.0
  %1369 = vmatpush1.msra.mxu0 0.0
  %1370 = vmatprep.subr.mxu0 0.0
  %1371 = vmatpush1.msra.mxu0 0.0
  %1372 = vmatprep.subr.mxu0 0.0
  %1373 = vmatpush1.msra.mxu0 0.0
  %1374 = vmatprep.subr.mxu0 0.0
  %1375 = vmatpush1.msra.mxu0 0.0
  %1376 = vmatprep.subr.mxu0 0.0
  %1377 = vmatpush1.msra.mxu0 0.0
  %1378 = vmatprep.subr.mxu0 0.0
  %1379 = vmatpush1.msra.mxu0 0.0
  %1380 = vmatprep.subr.mxu0 0.0
  %1381 = vmatpush1.msra.mxu0 0.0
  %1382 = vmatprep.subr.mxu0 0.0
  %1383 = vmatpush1.msra.mxu0 0.0
  %1384 = vmatprep.subr.mxu0 0.0
  %1385 = vmatpush1.msra.mxu0 0.0
  %1386 = vmatprep.mubr.f32.mxu0 0.0
  %1387 = vmatmul.mubr.f32.gmra.mrb[0].mxu0 %v827
  %v1388 = vpop.f32.mrb[0].mxu0
  %v1389 = vadd.f32 0.0, %v1388
  %v1390 = vpop.f32.mrb[0].mxu0
  %v1391 = vadd.f32 0.0, %v1390
  %1392 = vmatprep.mubr.f32.mxu0 0.0
  %1393 = vmatmul.mubr.f32.gmra.mrb[0].mxu0 %v828
  %v1394 = vpop.f32.mrb[0].mxu0
  %v1395 = vadd.f32 0.0, %v1394
  %v1396 = vpop.f32.mrb[0].mxu0
  %v1397 = vadd.f32 0.0, %v1396
  %1398 = vmatprep.mubr.f32.mxu0 0.0
  %1399 = vmatmul.mubr.f32.gmra.mrb[0].mxu0 %v829
  %v1400 = vpop.f32.mrb[0].mxu0
  %v1401 = vadd.f32 0.0, %v1400
  %v1402 = vpop.f32.mrb[0].mxu0
  %v1403 = vadd.f32 0.0, %v1402
  %1404 = vmatprep.mubr.f32.mxu0 0.0
  %1405 = vmatmul.mubr.f32.gmra.mrb[0].mxu0 %v830
  %v1406 = vpop.f32.mrb[0].mxu0
  %v1407 = vadd.f32 0.0, %v1406
  %v1408 = vpop.f32.mrb[0].mxu0
  %v1409 = vadd.f32 0.0, %v1408
  %1410 = vmatprep.mubr.f32.mxu0 0.0
  %1411 = vmatmul.mubr.f32.gmra.mrb[0].mxu0 %v831
  %v1412 = vpop.f32.mrb[0].mxu0
  %v1413 = vadd.f32 0.0, %v1412
  %v1414 = vpop.f32.mrb[0].mxu0
  %v1415 = vadd.f32 0.0, %v1414
  %1416 = vmatprep.mubr.f32.mxu0 0.0
  %1417 = vmatmul.mubr.f32.gmra.mrb[0].mxu0 %v832
  %v1418 = vpop.f32.mrb[0].mxu0
  %v1419 = vadd.f32 0.0, %v1418
  %v1420 = vpop.f32.mrb[0].mxu0
  %v1421 = vadd.f32 0.0, %v1420
  %1422 = vmatprep.mubr.f32.mxu0 0.0
  %1423 = vmatmul.mubr.f32.gmra.mrb[0].mxu0 %v833
  %v1424 = vpop.f32.mrb[0].mxu0
  %v1425 = vadd.f32 0.0, %v1424
  %v1426 = vpop.f32.mrb[0].mxu0
  %v1427 = vadd.f32 0.0, %v1426
  %1428 = vmatprep.mubr.f32.mxu0 0.0
  %1429 = vmatmul.mubr.f32.gmra.mrb[0].mxu0 %v834
  %v1430 = vpop.f32.mrb[0].mxu0
  %v1431 = vadd.f32 0.0, %v1430
  %v1432 = vpop.f32.mrb[0].mxu0
  %v1433 = vadd.f32 0.0, %v1432
  %1434 = vdwg.mxu0
  %v1435 = vadd.f32 %v1273, %v1389
  %v1436 = vadd.f32 %v1274, %v1391
  %v1437 = vadd.f32 %v1275, %v1395
  %v1438 = vadd.f32 %v1276, %v1397
  %v1439 = vadd.f32 %v1277, %v1401
  %v1440 = vadd.f32 %v1278, %v1403
  %v1441 = vadd.f32 %v1279, %v1407
  %v1442 = vadd.f32 %v1280, %v1409
  %v1443 = vadd.f32 %v1281, %v1413
  %v1444 = vadd.f32 %v1282, %v1415
  %v1445 = vadd.f32 %v1283, %v1419
  %v1446 = vadd.f32 %v1284, %v1421
  %v1447 = vadd.f32 %v1285, %v1425
  %v1448 = vadd.f32 %v1286, %v1427
  %v1449 = vadd.f32 %v1287, %v1431
  %v1450 = vadd.f32 %v1288, %v1433
  %s1451 = scalar_lea.vmem %s3, 1024
  %v1452 = vld [vmem:[%s1451] sm:$0xff]
  %v1453 = vld [vmem:[%s1451 + $0x8] sm:$0xff]
  %v1454 = vld [vmem:[%s1451 + $0x10] sm:$0xff]
  %v1455 = vld [vmem:[%s1451 + $0x18] sm:$0xff]
  %v1456 = vld [vmem:[%s1451 + $0x20] sm:$0xff]
  %v1457 = vld [vmem:[%s1451 + $0x28] sm:$0xff]
  %v1458 = vld [vmem:[%s1451 + $0x30] sm:$0xff]
  %v1459 = vld [vmem:[%s1451 + $0x38] sm:$0xff]
  %v1460 = vld [vmem:[%s1451 + $0x40] sm:$0xff]
  %v1461 = vld [vmem:[%s1451 + $0x48] sm:$0xff]
  %v1462 = vld [vmem:[%s1451 + $0x50] sm:$0xff]
  %v1463 = vld [vmem:[%s1451 + $0x58] sm:$0xff]
  %v1464 = vld [vmem:[%s1451 + $0x60] sm:$0xff]
  %v1465 = vld [vmem:[%s1451 + $0x68] sm:$0xff]
  %v1466 = vld [vmem:[%s1451 + $0x70] sm:$0xff]
  %v1467 = vld [vmem:[%s1451 + $0x78] sm:$0xff]
  %v1468 = vld [vmem:[%s1451 + $0x80] sm:$0xff]
  %v1469 = vld [vmem:[%s1451 + $0x88] sm:$0xff]
  %v1470 = vld [vmem:[%s1451 + $0x90] sm:$0xff]
  %v1471 = vld [vmem:[%s1451 + $0x98] sm:$0xff]
  %v1472 = vld [vmem:[%s1451 + $0xa0] sm:$0xff]
  %v1473 = vld [vmem:[%s1451 + $0xa8] sm:$0xff]
  %v1474 = vld [vmem:[%s1451 + $0xb0] sm:$0xff]
  %v1475 = vld [vmem:[%s1451 + $0xb8] sm:$0xff]
  %v1476 = vld [vmem:[%s1451 + $0xc0] sm:$0xff]
  %v1477 = vld [vmem:[%s1451 + $0xc8] sm:$0xff]
  %v1478 = vld [vmem:[%s1451 + $0xd0] sm:$0xff]
  %v1479 = vld [vmem:[%s1451 + $0xd8] sm:$0xff]
  %v1480 = vld [vmem:[%s1451 + $0xe0] sm:$0xff]
  %v1481 = vld [vmem:[%s1451 + $0xe8] sm:$0xff]
  %v1482 = vld [vmem:[%s1451 + $0xf0] sm:$0xff]
  %v1483 = vld [vmem:[%s1451 + $0xf8] sm:$0xff]
  %1484 = vmatprep.subr.mxu0 %v1453
  %1485 = vmatpush1.msra.mxu0 %v1452
  %1486 = vmatprep.subr.mxu0 %v1455
  %1487 = vmatpush1.msra.mxu0 %v1454
  %1488 = vmatprep.subr.mxu0 %v1457
  %1489 = vmatpush1.msra.mxu0 %v1456
  %1490 = vmatprep.subr.mxu0 %v1459
  %1491 = vmatpush1.msra.mxu0 %v1458
  %1492 = vmatprep.subr.mxu0 %v1461
  %1493 = vmatpush1.msra.mxu0 %v1460
  %1494 = vmatprep.subr.mxu0 %v1463
  %1495 = vmatpush1.msra.mxu0 %v1462
  %1496 = vmatprep.subr.mxu0 %v1465
  %1497 = vmatpush1.msra.mxu0 %v1464
  %1498 = vmatprep.subr.mxu0 %v1467
  %1499 = vmatpush1.msra.mxu0 %v1466
  %1500 = vmatprep.subr.mxu0 %v1469
  %1501 = vmatpush1.msra.mxu0 %v1468
  %1502 = vmatprep.subr.mxu0 %v1471
  %1503 = vmatpush1.msra.mxu0 %v1470
  %1504 = vmatprep.subr.mxu0 %v1473
  %1505 = vmatpush1.msra.mxu0 %v1472
  %1506 = vmatprep.subr.mxu0 %v1475
  %1507 = vmatpush1.msra.mxu0 %v1474
  %1508 = vmatprep.subr.mxu0 %v1477
  %1509 = vmatpush1.msra.mxu0 %v1476
  %1510 = vmatprep.subr.mxu0 %v1479
  %1511 = vmatpush1.msra.mxu0 %v1478
  %1512 = vmatprep.subr.mxu0 %v1481
  %1513 = vmatpush1.msra.mxu0 %v1480
  %1514 = vmatprep.subr.mxu0 %v1483
  %1515 = vmatpush1.msra.mxu0 %v1482
  %1516 = vmatprep.subr.mxu0 0.0
  %1517 = vmatpush1.msra.mxu0 0.0
  %1518 = vmatprep.subr.mxu0 0.0
  %1519 = vmatpush1.msra.mxu0 0.0
  %1520 = vmatprep.subr.mxu0 0.0
  %1521 = vmatpush1.msra.mxu0 0.0
  %1522 = vmatprep.subr.mxu0 0.0
  %1523 = vmatpush1.msra.mxu0 0.0
  %1524 = vmatprep.subr.mxu0 0.0
  %1525 = vmatpush1.msra.mxu0 0.0
  %1526 = vmatprep.subr.mxu0 0.0
  %1527 = vmatpush1.msra.mxu0 0.0
  %1528 = vmatprep.subr.mxu0 0.0
  %1529 = vmatpush1.msra.mxu0 0.0
  %1530 = vmatprep.subr.mxu0 0.0
  %1531 = vmatpush1.msra.mxu0 0.0
  %1532 = vmatprep.subr.mxu0 0.0
  %1533 = vmatpush1.msra.mxu0 0.0
  %1534 = vmatprep.subr.mxu0 0.0
  %1535 = vmatpush1.msra.mxu0 0.0
  %1536 = vmatprep.subr.mxu0 0.0
  %1537 = vmatpush1.msra.mxu0 0.0
  %1538 = vmatprep.subr.mxu0 0.0
  %1539 = vmatpush1.msra.mxu0 0.0
  %1540 = vmatprep.subr.mxu0 0.0
  %1541 = vmatpush1.msra.mxu0 0.0
  %1542 = vmatprep.subr.mxu0 0.0
  %1543 = vmatpush1.msra.mxu0 0.0
  %1544 = vmatprep.subr.mxu0 0.0
  %1545 = vmatpush1.msra.mxu0 0.0
  %1546 = vmatprep.subr.mxu0 0.0
  %1547 = vmatpush1.msra.mxu0 0.0
  %1548 = vmatprep.mubr.f32.mxu0 0.0
  %1549 = vmatmul.mubr.f32.gmra.mrb[0].mxu0 %v828
  %v1550 = vpop.f32.mrb[0].mxu0
  %v1551 = vadd.f32 0.0, %v1550
  %v1552 = vpop.f32.mrb[0].mxu0
  %v1553 = vadd.f32 0.0, %v1552
  %1554 = vmatprep.mubr.f32.mxu0 0.0
  %1555 = vmatmul.mubr.f32.gmra.mrb[0].mxu0 %v829
  %v1556 = vpop.f32.mrb[0].mxu0
  %v1557 = vadd.f32 0.0, %v1556
  %v1558 = vpop.f32.mrb[0].mxu0
  %v1559 = vadd.f32 0.0, %v1558
  %1560 = vmatprep.mubr.f32.mxu0 0.0
  %1561 = vmatmul.mubr.f32.gmra.mrb[0].mxu0 %v830
  %v1562 = vpop.f32.mrb[0].mxu0
  %v1563 = vadd.f32 0.0, %v1562
  %v1564 = vpop.f32.mrb[0].mxu0
  %v1565 = vadd.f32 0.0, %v1564
  %1566 = vmatprep.mubr.f32.mxu0 0.0
  %1567 = vmatmul.mubr.f32.gmra.mrb[0].mxu0 %v831
  %v1568 = vpop.f32.mrb[0].mxu0
  %v1569 = vadd.f32 0.0, %v1568
  %v1570 = vpop.f32.mrb[0].mxu0
  %v1571 = vadd.f32 0.0, %v1570
  %1572 = vmatprep.mubr.f32.mxu0 0.0
  %1573 = vmatmul.mubr.f32.gmra.mrb[0].mxu0 %v832
  %v1574 = vpop.f32.mrb[0].mxu0
  %v1575 = vadd.f32 0.0, %v1574
  %v1576 = vpop.f32.mrb[0].mxu0
  %v1577 = vadd.f32 0.0, %v1576
  %1578 = vmatprep.mubr.f32.mxu0 0.0
  %1579 = vmatmul.mubr.f32.gmra.mrb[0].mxu0 %v833
  %v1580 = vpop.f32.mrb[0].mxu0
  %v1581 = vadd.f32 0.0, %v1580
  %v1582 = vpop.f32.mrb[0].mxu0
  %v1583 = vadd.f32 0.0, %v1582
  %1584 = vmatprep.mubr.f32.mxu0 0.0
  %1585 = vmatmul.mubr.f32.gmra.mrb[0].mxu0 %v834
  %v1586 = vpop.f32.mrb[0].mxu0
  %v1587 = vadd.f32 0.0, %v1586
  %v1588 = vpop.f32.mrb[0].mxu0
  %v1589 = vadd.f32 0.0, %v1588
  %1590 = vmatprep.mubr.f32.mxu0 0.0
  %1591 = vmatmul.mubr.f32.gmra.mrb[0].mxu0 %v835
  %v1592 = vpop.f32.mrb[0].mxu0
  %v1593 = vadd.f32 0.0, %v1592
  %v1594 = vpop.f32.mrb[0].mxu0
  %v1595 = vadd.f32 0.0, %v1594
  %1596 = vdwg.mxu0
  %v1597 = vadd.f32 %v1435, %v1551
  %v1598 = vadd.f32 %v1436, %v1553
  %v1599 = vadd.f32 %v1437, %v1557
  %v1600 = vadd.f32 %v1438, %v1559
  %v1601 = vadd.f32 %v1439, %v1563
  %v1602 = vadd.f32 %v1440, %v1565
  %v1603 = vadd.f32 %v1441, %v1569
  %v1604 = vadd.f32 %v1442, %v1571
  %v1605 = vadd.f32 %v1443, %v1575
  %v1606 = vadd.f32 %v1444, %v1577
  %v1607 = vadd.f32 %v1445, %v1581
  %v1608 = vadd.f32 %v1446, %v1583
  %v1609 = vadd.f32 %v1447, %v1587
  %v1610 = vadd.f32 %v1448, %v1589
  %v1611 = vadd.f32 %v1449, %v1593
  %v1612 = vadd.f32 %v1450, %v1595
  %v1613 = vld [vmem:[%s4] sm:$0x3]
  %v1615 = vlaneseq
  %v1616 = vshrl.u32 %v1615, 7
  %v1617 = vsub.s32 0, %v1616
  %v1618 = vrot.slane %v1613, %v1617
  %v1619 = vlaneseq
  %v1620 = vshrl.u32 %v1619, 7
  %v1621 = vsub.s32 1, %v1620
  %v1622 = vrot.slane %v1613, %v1621
  %v1625 = vadd.f32 %v1597, %v1618
  %v1626 = vadd.f32 %v1598, %v1622
  %v1627 = vadd.f32 %v1599, %v1618
  %v1628 = vadd.f32 %v1600, %v1622
  %v1629 = vadd.f32 %v1601, %v1618
  %v1630 = vadd.f32 %v1602, %v1622
  %v1631 = vadd.f32 %v1603, %v1618
  %v1632 = vadd.f32 %v1604, %v1622
  %v1633 = vadd.f32 %v1605, %v1618
  %v1634 = vadd.f32 %v1606, %v1622
  %v1635 = vadd.f32 %v1607, %v1618
  %v1636 = vadd.f32 %v1608, %v1622
  %v1637 = vadd.f32 %v1609, %v1618
  %v1638 = vadd.f32 %v1610, %v1622
  %v1639 = vadd.f32 %v1611, %v1618
  %v1640 = vadd.f32 %v1612, %v1622
  %v1641 = vmax.f32 %v1625, %v1627
  %v1642 = vmax.f32 %v1626, %v1628
  %v1643 = vmax.f32 %v1629, %v1631
  %v1644 = vmax.f32 %v1630, %v1632
  %v1645 = vmax.f32 %v1633, %v1635
  %v1646 = vmax.f32 %v1634, %v1636
  %v1647 = vmax.f32 %v1637, %v1639
  %v1648 = vmax.f32 %v1638, %v1640
  %v1649 = vmax.f32 %v1641, %v1642
  %v1650 = vmax.f32 %v1643, %v1644
  %v1651 = vmax.f32 %v1645, %v1646
  %v1652 = vmax.f32 %v1647, %v1648
  %v1653 = vmax.f32 %v1649, 0.0
  %v1654 = vmax.f32 %v1650, 0.0
  %v1655 = vmax.f32 %v1651, 0.0
  %v1656 = vmax.f32 %v1652, 0.0
  %v1657 = vld [vmem:[%s5] sm:$0xff]
  %v1658 = vld [vmem:[%s5 + $0x8] sm:$0xff]
  %v1659 = vld [vmem:[%s5 + $0x10] sm:$0xff]
  %v1660 = vld [vmem:[%s5 + $0x18] sm:$0xff]
  %v1661 = vld [vmem:[%s5 + $0x20] sm:$0xff]
  %v1662 = vld [vmem:[%s5 + $0x28] sm:$0xff]
  %v1663 = vld [vmem:[%s5 + $0x30] sm:$0xff]
  %v1664 = vld [vmem:[%s5 + $0x38] sm:$0xff]
  %v1665 = vld [vmem:[%s5 + $0x40] sm:$0xff]
  %v1666 = vld [vmem:[%s5 + $0x48] sm:$0xff]
  %v1667 = vld [vmem:[%s5 + $0x50] sm:$0xff]
  %v1668 = vld [vmem:[%s5 + $0x58] sm:$0xff]
  %v1669 = vld [vmem:[%s5 + $0x60] sm:$0xff]
  %v1670 = vld [vmem:[%s5 + $0x68] sm:$0xff]
  %v1671 = vld [vmem:[%s5 + $0x70] sm:$0xff]
  %v1672 = vld [vmem:[%s5 + $0x78] sm:$0xff]
  %s1673 = scalar_lea.vmem %s5, 128
  %v1674 = vld [vmem:[%s1673] sm:$0xff]
  %v1675 = vld [vmem:[%s1673 + $0x8] sm:$0xff]
  %v1676 = vld [vmem:[%s1673 + $0x10] sm:$0xff]
  %v1677 = vld [vmem:[%s1673 + $0x18] sm:$0xff]
  %v1678 = vld [vmem:[%s1673 + $0x20] sm:$0xff]
  %v1679 = vld [vmem:[%s1673 + $0x28] sm:$0xff]
  %v1680 = vld [vmem:[%s1673 + $0x30] sm:$0xff]
  %v1681 = vld [vmem:[%s1673 + $0x38] sm:$0xff]
  %v1682 = vld [vmem:[%s1673 + $0x40] sm:$0xff]
  %v1683 = vld [vmem:[%s1673 + $0x48] sm:$0xff]
  %v1684 = vld [vmem:[%s1673 + $0x50] sm:$0xff]
  %v1685 = vld [vmem:[%s1673 + $0x58] sm:$0xff]
  %v1686 = vld [vmem:[%s1673 + $0x60] sm:$0xff]
  %v1687 = vld [vmem:[%s1673 + $0x68] sm:$0xff]
  %v1688 = vld [vmem:[%s1673 + $0x70] sm:$0xff]
  %v1689 = vld [vmem:[%s1673 + $0x78] sm:$0xff]
  %1690 = vmatprep.subr.mxu0 0.0
  %1691 = vmatpush1.msra.mxu0 %v1674
  %1692 = vmatprep.subr.mxu0 0.0
  %1693 = vmatpush1.msra.mxu0 %v1675
  %1694 = vmatprep.subr.mxu0 0.0
  %1695 = vmatpush1.msra.mxu0 %v1676
  %1696 = vmatprep.subr.mxu0 0.0
  %1697 = vmatpush1.msra.mxu0 %v1677
  %1698 = vmatprep.subr.mxu0 0.0
  %1699 = vmatpush1.msra.mxu0 %v1678
  %1700 = vmatprep.subr.mxu0 0.0
  %1701 = vmatpush1.msra.mxu0 %v1679
  %1702 = vmatprep.subr.mxu0 0.0
  %1703 = vmatpush1.msra.mxu0 %v1680
  %1704 = vmatprep.subr.mxu0 0.0
  %1705 = vmatpush1.msra.mxu0 %v1681
  %1706 = vmatprep.subr.mxu0 0.0
  %1707 = vmatpush1.msra.mxu0 %v1682
  %1708 = vmatprep.subr.mxu0 0.0
  %1709 = vmatpush1.msra.mxu0 %v1683
  %1710 = vmatprep.subr.mxu0 0.0
  %1711 = vmatpush1.msra.mxu0 %v1684
  %1712 = vmatprep.subr.mxu0 0.0
  %1713 = vmatpush1.msra.mxu0 %v1685
  %1714 = vmatprep.subr.mxu0 0.0
  %1715 = vmatpush1.msra.mxu0 %v1686
  %1716 = vmatprep.subr.mxu0 0.0
  %1717 = vmatpush1.msra.mxu0 %v1687
  %1718 = vmatprep.subr.mxu0 0.0
  %1719 = vmatpush1.msra.mxu0 %v1688
  %1720 = vmatprep.subr.mxu0 0.0
  %1721 = vmatpush1.msra.mxu0 %v1689
  %1722 = vmatprep.subr.mxu0 0.0
  %1723 = vmatpush1.msra.mxu0 0.0
  %1724 = vmatprep.subr.mxu0 0.0
  %1725 = vmatpush1.msra.mxu0 0.0
  %1726 = vmatprep.subr.mxu0 0.0
  %1727 = vmatpush1.msra.mxu0 0.0
  %1728 = vmatprep.subr.mxu0 0.0
  %1729 = vmatpush1.msra.mxu0 0.0
  %1730 = vmatprep.subr.mxu0 0.0
  %1731 = vmatpush1.msra.mxu0 0.0
  %1732 = vmatprep.subr.mxu0 0.0
  %1733 = vmatpush1.msra.mxu0 0.0
  %1734 = vmatprep.subr.mxu0 0.0
  %1735 = vmatpush1.msra.mxu0 0.0
  %1736 = vmatprep.subr.mxu0 0.0
  %1737 = vmatpush1.msra.mxu0 0.0
  %1738 = vmatprep.subr.mxu0 0.0
  %1739 = vmatpush1.msra.mxu0 0.0
  %1740 = vmatprep.subr.mxu0 0.0
  %1741 = vmatpush1.msra.mxu0 0.0
  %1742 = vmatprep.subr.mxu0 0.0
  %1743 = vmatpush1.msra.mxu0 0.0
  %1744 = vmatprep.subr.mxu0 0.0
  %1745 = vmatpush1.msra.mxu0 0.0
  %1746 = vmatprep.subr.mxu0 0.0
  %1747 = vmatpush1.msra.mxu0 0.0
  %1748 = vmatprep.subr.mxu0 0.0
  %1749 = vmatpush1.msra.mxu0 0.0
  %1750 = vmatprep.subr.mxu0 0.0
  %1751 = vmatpush1.msra.mxu0 0.0
  %1752 = vmatprep.subr.mxu0 0.0
  %1753 = vmatpush1.msra.mxu0 0.0
  %1754 = vmatprep.mubr.f32.mxu0 0.0
  %1755 = vmatmul.mubr.f32.gmra.mrb[0].mxu0 %v1654
  %v1756 = vpop.f32.mrb[0].mxu0
  %v1757 = vadd.f32 0.0, %v1756
  %v1758 = vpop.f32.mrb[0].mxu0
  %1759 = vdwg.mxu0
  %1760 = vmatprep.subr.mxu0 0.0
  %1761 = vmatpush1.msra.mxu0 %v1657
  %1762 = vmatprep.subr.mxu0 0.0
  %1763 = vmatpush1.msra.mxu0 %v1658
  %1764 = vmatprep.subr.mxu0 0.0
  %1765 = vmatpush1.msra.mxu0 %v1659
  %1766 = vmatprep.subr.mxu0 0.0
  %1767 = vmatpush1.msra.mxu0 %v1660
  %1768 = vmatprep.subr.mxu0 0.0
  %1769 = vmatpush1.msra.mxu0 %v1661
  %1770 = vmatprep.subr.mxu0 0.0
  %1771 = vmatpush1.msra.mxu0 %v1662
  %1772 = vmatprep.subr.mxu0 0.0
  %1773 = vmatpush1.msra.mxu0 %v1663
  %1774 = vmatprep.subr.mxu0 0.0
  %1775 = vmatpush1.msra.mxu0 %v1664
  %1776 = vmatprep.subr.mxu0 0.0
  %1777 = vmatpush1.msra.mxu0 %v1665
  %1778 = vmatprep.subr.mxu0 0.0
  %1779 = vmatpush1.msra.mxu0 %v1666
  %1780 = vmatprep.subr.mxu0 0.0
  %1781 = vmatpush1.msra.mxu0 %v1667
  %1782 = vmatprep.subr.mxu0 0.0
  %1783 = vmatpush1.msra.mxu0 %v1668
  %1784 = vmatprep.subr.mxu0 0.0
  %1785 = vmatpush1.msra.mxu0 %v1669
  %1786 = vmatprep.subr.mxu0 0.0
  %1787 = vmatpush1.msra.mxu0 %v1670
  %1788 = vmatprep.subr.mxu0 0.0
  %1789 = vmatpush1.msra.mxu0 %v1671
  %1790 = vmatprep.subr.mxu0 0.0
  %1791 = vmatpush1.msra.mxu0 %v1672
  %1792 = vmatprep.subr.mxu0 0.0
  %1793 = vmatpush1.msra.mxu0 0.0
  %1794 = vmatprep.subr.mxu0 0.0
  %1795 = vmatpush1.msra.mxu0 0.0
  %1796 = vmatprep.subr.mxu0 0.0
  %1797 = vmatpush1.msra.mxu0 0.0
  %1798 = vmatprep.subr.mxu0 0.0
  %1799 = vmatpush1.msra.mxu0 0.0
  %1800 = vmatprep.subr.mxu0 0.0
  %1801 = vmatpush1.msra.mxu0 0.0
  %1802 = vmatprep.subr.mxu0 0.0
  %1803 = vmatpush1.msra.mxu0 0.0
  %1804 = vmatprep.subr.mxu0 0.0
  %1805 = vmatpush1.msra.mxu0 0.0
  %1806 = vmatprep.subr.mxu0 0.0
  %1807 = vmatpush1.msra.mxu0 0.0
  %1808 = vmatprep.subr.mxu0 0.0
  %1809 = vmatpush1.msra.mxu0 0.0
  %1810 = vmatprep.subr.mxu0 0.0
  %1811 = vmatpush1.msra.mxu0 0.0
  %1812 = vmatprep.subr.mxu0 0.0
  %1813 = vmatpush1.msra.mxu0 0.0
  %1814 = vmatprep.subr.mxu0 0.0
  %1815 = vmatpush1.msra.mxu0 0.0
  %1816 = vmatprep.subr.mxu0 0.0
  %1817 = vmatpush1.msra.mxu0 0.0
  %1818 = vmatprep.subr.mxu0 0.0
  %1819 = vmatpush1.msra.mxu0 0.0
  %1820 = vmatprep.subr.mxu0 0.0
  %1821 = vmatpush1.msra.mxu0 0.0
  %1822 = vmatprep.subr.mxu0 0.0
  %1823 = vmatpush1.msra.mxu0 0.0
  %1824 = vmatprep.mubr.f32.mxu0 0.0
  %1825 = vmatmul.mubr.f32.gmra.mrb[0].mxu0 %v1653
  %v1826 = vpop.f32.mrb[0].mxu0
  %v1827 = vadd.f32 %v1757, %v1826
  %v1828 = vpop.f32.mrb[0].mxu0
  %1829 = vdwg.mxu0
  %s1830 = scalar_lea.vmem %s5, 256
  %v1831 = vld [vmem:[%s1830] sm:$0xff]
  %v1832 = vld [vmem:[%s1830 + $0x8] sm:$0xff]
  %v1833 = vld [vmem:[%s1830 + $0x10] sm:$0xff]
  %v1834 = vld [vmem:[%s1830 + $0x18] sm:$0xff]
  %v1835 = vld [vmem:[%s1830 + $0x20] sm:$0xff]
  %v1836 = vld [vmem:[%s1830 + $0x28] sm:$0xff]
  %v1837 = vld [vmem:[%s1830 + $0x30] sm:$0xff]
  %v1838 = vld [vmem:[%s1830 + $0x38] sm:$0xff]
  %v1839 = vld [vmem:[%s1830 + $0x40] sm:$0xff]
  %v1840 = vld [vmem:[%s1830 + $0x48] sm:$0xff]
  %v1841 = vld [vmem:[%s1830 + $0x50] sm:$0xff]
  %v1842 = vld [vmem:[%s1830 + $0x58] sm:$0xff]
  %v1843 = vld [vmem:[%s1830 + $0x60] sm:$0xff]
  %v1844 = vld [vmem:[%s1830 + $0x68] sm:$0xff]
  %v1845 = vld [vmem:[%s1830 + $0x70] sm:$0xff]
  %v1846 = vld [vmem:[%s1830 + $0x78] sm:$0xff]
  %1847 = vmatprep.subr.mxu0 0.0
  %1848 = vmatpush1.msra.mxu0 %v1831
  %1849 = vmatprep.subr.mxu0 0.0
  %1850 = vmatpush1.msra.mxu0 %v1832
  %1851 = vmatprep.subr.mxu0 0.0
  %1852 = vmatpush1.msra.mxu0 %v1833
  %1853 = vmatprep.subr.mxu0 0.0
  %1854 = vmatpush1.msra.mxu0 %v1834
  %1855 = vmatprep.subr.mxu0 0.0
  %1856 = vmatpush1.msra.mxu0 %v1835
  %1857 = vmatprep.subr.mxu0 0.0
  %1858 = vmatpush1.msra.mxu0 %v1836
  %1859 = vmatprep.subr.mxu0 0.0
  %1860 = vmatpush1.msra.mxu0 %v1837
  %1861 = vmatprep.subr.mxu0 0.0
  %1862 = vmatpush1.msra.mxu0 %v1838
  %1863 = vmatprep.subr.mxu0 0.0
  %1864 = vmatpush1.msra.mxu0 %v1839
  %1865 = vmatprep.subr.mxu0 0.0
  %1866 = vmatpush1.msra.mxu0 %v1840
  %1867 = vmatprep.subr.mxu0 0.0
  %1868 = vmatpush1.msra.mxu0 %v1841
  %1869 = vmatprep.subr.mxu0 0.0
  %1870 = vmatpush1.msra.mxu0 %v1842
  %1871 = vmatprep.subr.mxu0 0.0
  %1872 = vmatpush1.msra.mxu0 %v1843
  %1873 = vmatprep.subr.mxu0 0.0
  %1874 = vmatpush1.msra.mxu0 %v1844
  %1875 = vmatprep.subr.mxu0 0.0
  %1876 = vmatpush1.msra.mxu0 %v1845
  %1877 = vmatprep.subr.mxu0 0.0
  %1878 = vmatpush1.msra.mxu0 %v1846
  %1879 = vmatprep.subr.mxu0 0.0
  %1880 = vmatpush1.msra.mxu0 0.0
  %1881 = vmatprep.subr.mxu0 0.0
  %1882 = vmatpush1.msra.mxu0 0.0
  %1883 = vmatprep.subr.mxu0 0.0
  %1884 = vmatpush1.msra.mxu0 0.0
  %1885 = vmatprep.subr.mxu0 0.0
  %1886 = vmatpush1.msra.mxu0 0.0
  %1887 = vmatprep.subr.mxu0 0.0
  %1888 = vmatpush1.msra.mxu0 0.0
  %1889 = vmatprep.subr.mxu0 0.0
  %1890 = vmatpush1.msra.mxu0 0.0
  %1891 = vmatprep.subr.mxu0 0.0
  %1892 = vmatpush1.msra.mxu0 0.0
  %1893 = vmatprep.subr.mxu0 0.0
  %1894 = vmatpush1.msra.mxu0 0.0
  %1895 = vmatprep.subr.mxu0 0.0
  %1896 = vmatpush1.msra.mxu0 0.0
  %1897 = vmatprep.subr.mxu0 0.0
  %1898 = vmatpush1.msra.mxu0 0.0
  %1899 = vmatprep.subr.mxu0 0.0
  %1900 = vmatpush1.msra.mxu0 0.0
  %1901 = vmatprep.subr.mxu0 0.0
  %1902 = vmatpush1.msra.mxu0 0.0
  %1903 = vmatprep.subr.mxu0 0.0
  %1904 = vmatpush1.msra.mxu0 0.0
  %1905 = vmatprep.subr.mxu0 0.0
  %1906 = vmatpush1.msra.mxu0 0.0
  %1907 = vmatprep.subr.mxu0 0.0
  %1908 = vmatpush1.msra.mxu0 0.0
  %1909 = vmatprep.subr.mxu0 0.0
  %1910 = vmatpush1.msra.mxu0 0.0
  %1911 = vmatprep.mubr.f32.mxu0 0.0
  %1912 = vmatmul.mubr.f32.gmra.mrb[0].mxu0 %v1655
  %v1913 = vpop.f32.mrb[0].mxu0
  %v1914 = vadd.f32 0.0, %v1913
  %v1915 = vpop.f32.mrb[0].mxu0
  %1916 = vdwg.mxu0
  %v1917 = vadd.f32 %v1827, %v1914
  %s1918 = scalar_lea.vmem %s5, 384
  %v1919 = vld [vmem:[%s1918] sm:$0xff]
  %v1920 = vld [vmem:[%s1918 + $0x8] sm:$0xff]
  %v1921 = vld [vmem:[%s1918 + $0x10] sm:$0xff]
  %v1922 = vld [vmem:[%s1918 + $0x18] sm:$0xff]
  %v1923 = vld [vmem:[%s1918 + $0x20] sm:$0xff]
  %v1924 = vld [vmem:[%s1918 + $0x28] sm:$0xff]
  %v1925 = vld [vmem:[%s1918 + $0x30] sm:$0xff]
  %v1926 = vld [vmem:[%s1918 + $0x38] sm:$0xff]
  %v1927 = vld [vmem:[%s1918 + $0x40] sm:$0xff]
  %v1928 = vld [vmem:[%s1918 + $0x48] sm:$0xff]
  %v1929 = vld [vmem:[%s1918 + $0x50] sm:$0xff]
  %v1930 = vld [vmem:[%s1918 + $0x58] sm:$0xff]
  %v1931 = vld [vmem:[%s1918 + $0x60] sm:$0xff]
  %v1932 = vld [vmem:[%s1918 + $0x68] sm:$0xff]
  %v1933 = vld [vmem:[%s1918 + $0x70] sm:$0xff]
  %v1934 = vld [vmem:[%s1918 + $0x78] sm:$0xff]
  %1935 = vmatprep.subr.mxu0 0.0
  %1936 = vmatpush1.msra.mxu0 %v1919
  %1937 = vmatprep.subr.mxu0 0.0
  %1938 = vmatpush1.msra.mxu0 %v1920
  %1939 = vmatprep.subr.mxu0 0.0
  %1940 = vmatpush1.msra.mxu0 %v1921
  %1941 = vmatprep.subr.mxu0 0.0
  %1942 = vmatpush1.msra.mxu0 %v1922
  %1943 = vmatprep.subr.mxu0 0.0
  %1944 = vmatpush1.msra.mxu0 %v1923
  %1945 = vmatprep.subr.mxu0 0.0
  %1946 = vmatpush1.msra.mxu0 %v1924
  %1947 = vmatprep.subr.mxu0 0.0
  %1948 = vmatpush1.msra.mxu0 %v1925
  %1949 = vmatprep.subr.mxu0 0.0
  %1950 = vmatpush1.msra.mxu0 %v1926
  %1951 = vmatprep.subr.mxu0 0.0
  %1952 = vmatpush1.msra.mxu0 %v1927
  %1953 = vmatprep.subr.mxu0 0.0
  %1954 = vmatpush1.msra.mxu0 %v1928
  %1955 = vmatprep.subr.mxu0 0.0
  %1956 = vmatpush1.msra.mxu0 %v1929
  %1957 = vmatprep.subr.mxu0 0.0
  %1958 = vmatpush1.msra.mxu0 %v1930
  %1959 = vmatprep.subr.mxu0 0.0
  %1960 = vmatpush1.msra.mxu0 %v1931
  %1961 = vmatprep.subr.mxu0 0.0
  %1962 = vmatpush1.msra.mxu0 %v1932
  %1963 = vmatprep.subr.mxu0 0.0
  %1964 = vmatpush1.msra.mxu0 %v1933
  %1965 = vmatprep.subr.mxu0 0.0
  %1966 = vmatpush1.msra.mxu0 %v1934
  %1967 = vmatprep.subr.mxu0 0.0
  %1968 = vmatpush1.msra.mxu0 0.0
  %1969 = vmatprep.subr.mxu0 0.0
  %1970 = vmatpush1.msra.mxu0 0.0
  %1971 = vmatprep.subr.mxu0 0.0
  %1972 = vmatpush1.msra.mxu0 0.0
  %1973 = vmatprep.subr.mxu0 0.0
  %1974 = vmatpush1.msra.mxu0 0.0
  %1975 = vmatprep.subr.mxu0 0.0
  %1976 = vmatpush1.msra.mxu0 0.0
  %1977 = vmatprep.subr.mxu0 0.0
  %1978 = vmatpush1.msra.mxu0 0.0
  %1979 = vmatprep.subr.mxu0 0.0
  %1980 = vmatpush1.msra.mxu0 0.0
  %1981 = vmatprep.subr.mxu0 0.0
  %1982 = vmatpush1.msra.mxu0 0.0
  %1983 = vmatprep.subr.mxu0 0.0
  %1984 = vmatpush1.msra.mxu0 0.0
  %1985 = vmatprep.subr.mxu0 0.0
  %1986 = vmatpush1.msra.mxu0 0.0
  %1987 = vmatprep.subr.mxu0 0.0
  %1988 = vmatpush1.msra.mxu0 0.0
  %1989 = vmatprep.subr.mxu0 0.0
  %1990 = vmatpush1.msra.mxu0 0.0
  %1991 = vmatprep.subr.mxu0 0.0
  %1992 = vmatpush1.msra.mxu0 0.0
  %1993 = vmatprep.subr.mxu0 0.0
  %1994 = vmatpush1.msra.mxu0 0.0
  %1995 = vmatprep.subr.mxu0 0.0
  %1996 = vmatpush1.msra.mxu0 0.0
  %1997 = vmatprep.subr.mxu0 0.0
  %1998 = vmatpush1.msra.mxu0 0.0
  %1999 = vmatprep.mubr.f32.mxu0 0.0
  %2000 = vmatmul.mubr.f32.gmra.mrb[0].mxu0 %v1656
  %v2001 = vpop.f32.mrb[0].mxu0
  %v2002 = vadd.f32 0.0, %v2001
  %v2003 = vpop.f32.mrb[0].mxu0
  %2004 = vdwg.mxu0
  %v2005 = vadd.f32 %v1917, %v2002
  %v2006 = vld [vmem:[%s6] sm:$0x1]
  %v2008 = vlaneseq
  %v2009 = vshrl.u32 %v2008, 7
  %v2010 = vsub.s32 0, %v2009
  %v2011 = vrot.slane %v2006, %v2010
  %v2013 = vadd.f32 %v2005, %v2011
  %v2014 = vmax.f32 %v2013, 0.0
  %v2015 = vld [vmem:[%s7] sm:$0xff]
  %v2016 = vld [vmem:[%s7 + $0x8] sm:$0xff]
  %v2017 = vld [vmem:[%s7 + $0x10] sm:$0xff]
  %v2018 = vld [vmem:[%s7 + $0x18] sm:$0xff]
  %v2019 = vld [vmem:[%s7 + $0x20] sm:$0xff]
  %v2020 = vld [vmem:[%s7 + $0x28] sm:$0xff]
  %v2021 = vld [vmem:[%s7 + $0x30] sm:$0x3]
  %v2022 = vld [vmem:[%s8] sm:$0x1]
  %v2024 = vlaneseq
  %v2025 = vshrl.u32 %v2024, 7
  %v2026 = vsub.s32 0, %v2025
  %v2027 = vrot.slane %v2022, %v2026
  %vm2029 = vcmask 408576
  %v2031 = vsel %vm2029, %v2014, 0
  %vm2033 = vcmask 1041408
  %v2035 = vsel %vm2033, %v2021, 0
  %2037 = vmatprep.subr.mxu0 0.0
  %2038 = vmatpush1.msra.mxu0 %v2015
  %2039 = vmatprep.subr.mxu0 0.0
  %2040 = vmatpush1.msra.mxu0 %v2016
  %2041 = vmatprep.subr.mxu0 0.0
  %2042 = vmatpush1.msra.mxu0 %v2017
  %2043 = vmatprep.subr.mxu0 0.0
  %2044 = vmatpush1.msra.mxu0 %v2018
  %2045 = vmatprep.subr.mxu0 0.0
  %2046 = vmatpush1.msra.mxu0 %v2019
  %2047 = vmatprep.subr.mxu0 0.0
  %2048 = vmatpush1.msra.mxu0 %v2020
  %2049 = vmatprep.subr.mxu0 0.0
  %2050 = vmatpush1.msra.mxu0 %v2035
  %2051 = vmatprep.subr.mxu0 0.0
  %2052 = vmatpush1.msra.mxu0 0.0
  %2053 = vmatprep.subr.mxu0 0.0
  %2054 = vmatpush1.msra.mxu0 0.0
  %2055 = vmatprep.subr.mxu0 0.0
  %2056 = vmatpush1.msra.mxu0 0.0
  %2057 = vmatprep.subr.mxu0 0.0
  %2058 = vmatpush1.msra.mxu0 0.0
  %2059 = vmatprep.subr.mxu0 0.0
  %2060 = vmatpush1.msra.mxu0 0.0
  %2061 = vmatprep.subr.mxu0 0.0
  %2062 = vmatpush1.msra.mxu0 0.0
  %2063 = vmatprep.subr.mxu0 0.0
  %2064 = vmatpush1.msra.mxu0 0.0
  %2065 = vmatprep.subr.mxu0 0.0
  %2066 = vmatpush1.msra.mxu0 0.0
  %2067 = vmatprep.subr.mxu0 0.0
  %2068 = vmatpush1.msra.mxu0 0.0
  %2069 = vmatprep.subr.mxu0 0.0
  %2070 = vmatpush1.msra.mxu0 0.0
  %2071 = vmatprep.subr.mxu0 0.0
  %2072 = vmatpush1.msra.mxu0 0.0
  %2073 = vmatprep.subr.mxu0 0.0
  %2074 = vmatpush1.msra.mxu0 0.0
  %2075 = vmatprep.subr.mxu0 0.0
  %2076 = vmatpush1.msra.mxu0 0.0
  %2077 = vmatprep.subr.mxu0 0.0
  %2078 = vmatpush1.msra.mxu0 0.0
  %2079 = vmatprep.subr.mxu0 0.0
  %2080 = vmatpush1.msra.mxu0 0.0
  %2081 = vmatprep.subr.mxu0 0.0
  %2082 = vmatpush1.msra.mxu0 0.0
  %2083 = vmatprep.subr.mxu0 0.0
  %2084 = vmatpush1.msra.mxu0 0.0
  %2085 = vmatprep.subr.mxu0 0.0
  %2086 = vmatpush1.msra.mxu0 0.0
  %2087 = vmatprep.subr.mxu0 0.0
  %2088 = vmatpush1.msra.mxu0 0.0
  %2089 = vmatprep.subr.mxu0 0.0
  %2090 = vmatpush1.msra.mxu0 0.0
  %2091 = vmatprep.subr.mxu0 0.0
  %2092 = vmatpush1.msra.mxu0 0.0
  %2093 = vmatprep.subr.mxu0 0.0
  %2094 = vmatpush1.msra.mxu0 0.0
  %2095 = vmatprep.subr.mxu0 0.0
  %2096 = vmatpush1.msra.mxu0 0.0
  %2097 = vmatprep.subr.mxu0 0.0
  %2098 = vmatpush1.msra.mxu0 0.0
  %2099 = vmatprep.subr.mxu0 0.0
  %2100 = vmatpush1.msra.mxu0 0.0
  %2101 = vmatprep.mubr.f32.mxu0 0.0
  %2102 = vmatmul.mubr.f32.gmra.mrb[0].mxu0 %v2031
  %v2103 = vpop.f32.mrb[0].mxu0
  %v2104 = vadd.f32 %v2027, %v2103
  %v2105 = vpop.f32.mrb[0].mxu0
  %2106 = vdwg.mxu0
  %2107 = vmax.xlane.f32.xlu0 %v2104
  %v2108 = vpop.xlane.xlu0 %2107
  %v2109 = vsub.f32 %v2104, %v2108
  %v2110 = vmul.f32 %v2109, 1.442695
  %v2111 = vpow.pop %v2110
  %2112 = vadd.xlane.f32.xlu0 %v2111
  %v2113 = vpop.xlane.xlu0 %2112
  %v2114 = vlog2.pop %v2113
  %v2115 = vmul.f32 %v2114, 0.6931472
  %v2116 = vadd.f32 %v2108, %v2115
  %v2117 = vsub.f32 %v2104, %v2116
  %2118 = vst [vmem:[%s9] sm:$0xff] %v2117
  // Predicated region
  $region38: #{single_network_forward.1} parent=0 // pred_check
    _
  $region39: #{single_network_forward.1} parent=0 // pred_check_branch
    %2120 = sbr.rel (0) target = $region41
  $region40: #{single_network_forward.1} parent=0 // pred_region
    _
  $region41: #{single_network_forward.1} parent=0 // pred_fallthru
    _
  // Predicated region
  $region42: #{single_network_forward.1} parent=0 // pred_check
    _
  $region43: #{single_network_forward.1} parent=0 // pred_check_branch
    %2122 = sbr.rel (0) target = $region45
  $region44: #{single_network_forward.1} parent=0 // pred_region
    _
  $region45: #{single_network_forward.1} parent=0 // pred_fallthru
    _

</llo_original>
